<compile_context>
chip_gen: v6e
topology: v6e:2x2x1
jax: 0.10.0
libtpu: 0.0.40
codegen_flags: <defaults>
</compile_context>

<pallas_src>
import math
import functools

import jax
import jax.numpy as jnp
from jax import lax
from jax.experimental import pallas as pl
from jax.experimental.pallas import tpu as pltpu


def _round_up(v, m):
    return (v + m - 1) // m * m


def _pad2(a, rows, cols):
    return jnp.pad(a, ((0, rows - a.shape[0]), (0, cols - a.shape[1])))


def _pad_conv_weight(w, nhidden, hpad, variant):
    """Pad a GraphConvolution weight to lane-aligned shape, keeping the
    variant concat split aligned to the padded hidden width."""
    if variant:
        wp = jnp.zeros((2 * hpad, hpad), w.dtype)
        wp = wp.at[:nhidden, :nhidden].set(w[:nhidden])
        wp = wp.at[hpad:hpad + nhidden, :nhidden].set(w[nhidden:])
    else:
        wp = jnp.zeros((hpad, hpad), w.dtype)
        wp = wp.at[:nhidden, :nhidden].set(w)
    return wp


def _vmem_capacity_bytes():
    try:
        cap = getattr(pltpu.get_tpu_info(), "vmem_capacity_bytes", None)
        if cap:
            return int(cap)
    except Exception:
        pass
    return 64 * 1024 * 1024   # conservative fallback: smallest of v5e/v6e/v7x


# ----------------------------------------------------------------------------
# Fused kernel: fc0 + nlayers * GraphConvolution(residual=True, +ReLU) + fc1
# grid = (nlayers,), "arbitrary" (sequential dependence through h).
# ----------------------------------------------------------------------------
def _deepgcn_fused_kernel(theta_ref,            # SMEM [L]            f32
                          x_hbm,                # HBM  [Np, Fp]       bf16 (l==0 only)
                          w0_hbm,               # HBM  [Fp, Hp]       bf16 (l==0 only)
                          b0_ref,               # VMEM [1, Hp]        f32  (resident)
                          adj_hbm,              # HBM  [Np, Np]       bf16 (copied once)
                          wconv_ref,            # VMEM [in_f_p, Hp]   bf16 (streamed)
                          w1_ref, b1_ref,       # VMEM [Hp,Hp] bf16, [1,Hp] f32
                          out_ref,              # VMEM [Np, Hp]       f32  (resident)
                          adj_vmem,             # VMEM scratch [Np,Np] bf16 (single buf)
                          h_ref, h0_ref,        # VMEM scratch [Np,Hp] f32 (persist)
                          hnew_ref,             # VMEM scratch [Np,Hp] f32 (staging)
                          dma_sems,             # DMA semaphores (3,)
                          *, alpha, variant, row_tile):
    l = pl.program_id(0)
    f32, bf16 = jnp.float32, jnp.bfloat16
    npad, hpad = h_ref.shape
    n_tiles = npad // row_tile

    # ---- layer-0 prologue: adj HBM->VMEM once; h = relu(x @ W0 + b0) --------
    @pl.when(l == 0)
    def _prologue():
        adj_cp = pltpu.make_async_copy(adj_hbm, adj_vmem, dma_sems.at[0])
        adj_cp.start()

        def _fc0(xbuf, w0buf):
            x_cp = pltpu.make_async_copy(x_hbm, xbuf, dma_sems.at[1])
            w_cp = pltpu.make_async_copy(w0_hbm, w0buf, dma_sems.at[2])
            x_cp.start()
            w_cp.start()
            x_cp.wait()
            w_cp.wait()
            h = jnp.dot(xbuf[...], w0buf[...], preferred_element_type=f32)
            h = jnp.maximum(h + b0_ref[...], 0.0)
            # Padded rows hold relu(b0) != 0: harmless because adj's padded
            # rows/columns are zero (wrapper invariant, see module docstring).
            h_ref[...] = h
            h0_ref[...] = h

        # x / W0 live only for the duration of this scope (freed afterwards).
        pl.run_scoped(_fc0,
                      pltpu.VMEM(x_hbm.shape, x_hbm.dtype),
                      pltpu.VMEM(w0_hbm.shape, w0_hbm.dtype))
        adj_cp.wait()

    # ---- GCNII layer l (residual=True) fused with trailing ReLU -------------
    theta = theta_ref[l]
    one_m_theta = 1.0 - theta
    h_bf = h_ref[...].astype(bf16)           # contraction operand of adj @ h

    def _tile_body(t, carry):
        r0 = pl.multiple_of(t * row_tile, row_tile)
        rows = pl.ds(r0, row_tile)
        hi = jnp.dot(adj_vmem[rows, :], h_bf, preferred_element_type=f32)
        h0_t = h0_ref[rows, :]
        if variant:
            # cat([hi, h0], 1) @ W == hi @ W[:H] + h0 @ W[H:]  (exact fold)
            # TODO(synk): on v6e/v7x (256-deep MXU) benchmark a lane-concat
            # [TM, 2*Hp] operand feeding a single K=2*Hp dot instead.
            sw = (jnp.dot(hi.astype(bf16), wconv_ref[0:hpad, :],
                          preferred_element_type=f32)
                  + jnp.dot(h0_t.astype(bf16), wconv_ref[hpad:2 * hpad, :],
                            preferred_element_type=f32))
            r = (1.0 - alpha) * hi + alpha * h0_t
        else:
            r = (1.0 - alpha) * hi + alpha * h0_t      # support == r
            sw = jnp.dot(r.astype(bf16), wconv_ref[...],
                         preferred_element_type=f32)
        h_new = jnp.maximum(theta * sw + one_m_theta * r + h_ref[rows, :], 0.0)
        hnew_ref[rows, :] = h_new
        return carry

    # Real loop (not unrolled) so the per-tile f32 temporaries stay TMxHp.
    lax.fori_loop(0, n_tiles, _tile_body, 0)
    h_ref[...] = hnew_ref[...]

    # ---- final-layer epilogue: out = h @ W1 + b1 (no activation) ------------
    @pl.when(l == pl.num_programs(0) - 1)
    def _epilogue():
        y = jnp.dot(h_ref[...].astype(bf16), w1_ref[...],
                    preferred_element_type=f32)
        out_ref[...] = (y + b1_ref[...]).astype(out_ref.dtype)


# ----------------------------------------------------------------------------
# Wrapper
# ----------------------------------------------------------------------------
def deepgcn_forward(x, adj, params, *, lamda, alpha, variant):
    """Inference-mode deepGCN forward (dropout == identity), fused kernel."""
    n, nfeat = x.shape
    nhidden = params["fc0_w"].shape[1]
    nlayers = len(params["conv_ws"])

    npad = _round_up(n, 128)       # lane-dense adjacency (128, not 8)
    fpad = _round_up(nfeat, 128)
    hpad = _round_up(nhidden, 128)
    in_f_pad = 2 * hpad if variant else hpad
    row_tile = next(t for t in (512, 256, 128) if npad % t == 0)

    bf16 = jnp.bfloat16
    # Pure-MXU operands stored/DMA'd in bf16; biases stay f32 (VPU math).
    x_p = _pad2(x, npad, fpad).astype(bf16)
    adj_p = _pad2(adj, npad, npad).astype(bf16)
    w0_p = _pad2(params["fc0_w"], fpad, hpad).astype(bf16)
    b0_p = _pad2(params["fc0_b"], 1, hpad).astype(jnp.float32)
    w1_p = _pad2(params["fc1_w"], hpad, hpad).astype(bf16)
    b1_p = _pad2(params["fc1_b"], 1, hpad).astype(jnp.float32)
    wconv_p = jnp.stack([_pad_conv_weight(w, nhidden, hpad, variant)
                         for w in params["conv_ws"]]).astype(bf16)
    thetas = jnp.array([min(1.0, math.log(lamda / (i + 1) + 1.0))
                        for i in range(nlayers)], jnp.float32)

    # ---- generation-aware VMEM accounting ------------------------------------
    est = (npad * npad * 2                       # adj scratch (single-buffered)
           + 3 * npad * hpad * 4                 # h, h0, h_new scratch
           + 2 * npad * hpad * 4                 # output block (double-buffered)
           + 2 * 2 * in_f_pad * hpad             # streamed conv weight, 2 buffers
           + 2 * (hpad * hpad * 2 + 2 * hpad * 4)  # W1 / b0 / b1 blocks, 2 buffers
           + npad * hpad * 2                     # h cast to bf16 matmul operand
           + 6 * row_tile * hpad * 4             # per-row-tile f32 temporaries
           + npad * fpad * 2 + fpad * hpad * 2)  # scoped x / W0 at layer 0
    need = int(est * 1.2) + (2 << 20)
    cap = _vmem_capacity_bytes()
    if need > int(cap * 0.95):
        # TODO(synk): implement the K-tiled adj@h path (stream adjacency blocks
        # from HBM via pltpu.emit_pipeline) for graphs beyond this cutoff.
        raise NotImplementedError(
            "dense adjacency does not fit VMEM on this TPU generation; "
            "K-tiled adjacency path not implemented")
    vmem_kwargs = {}
    if need > 16 * 1024 * 1024:                  # above the smallest default limit
        vmem_kwargs["vmem_limit_bytes"] = min(need, int(cap * 0.9))

    kernel = functools.partial(_deepgcn_fused_kernel, alpha=float(alpha),
                               variant=bool(variant), row_tile=row_tile)

    out_pad = pl.pallas_call(
        kernel,
        out_shape=jax.ShapeDtypeStruct((npad, hpad), jnp.float32),
        grid_spec=pltpu.PrefetchScalarGridSpec(
            num_scalar_prefetch=0,
            grid=(nlayers,),
            in_specs=[
                pl.BlockSpec(memory_space=pltpu.SMEM),        # thetas
                pl.BlockSpec(memory_space=pl.ANY),            # x   (HBM, l==0 only)
                pl.BlockSpec(memory_space=pl.ANY),            # W0  (HBM, l==0 only)
                pl.BlockSpec((1, hpad), lambda l: (0, 0)),    # b0  (tiny, resident)
                pl.BlockSpec(memory_space=pl.ANY),            # adj (HBM, copied once)
                pl.BlockSpec((None, in_f_pad, hpad), lambda l: (l, 0, 0)),  # conv W[l]
                pl.BlockSpec((hpad, hpad), lambda l: (0, 0)),  # W1 (resident)
                pl.BlockSpec((1, hpad), lambda l: (0, 0)),     # b1 (resident)
            ],
            out_specs=pl.BlockSpec((npad, hpad), lambda l: (0, 0)),
            scratch_shapes=[
                pltpu.VMEM((npad, npad), bf16),         # adj, single-buffered
                pltpu.VMEM((npad, hpad), jnp.float32),  # h
                pltpu.VMEM((npad, hpad), jnp.float32),  # h0
                pltpu.VMEM((npad, hpad), jnp.float32),  # h_new staging
                pltpu.SemaphoreType.DMA((3,)),          # adj / x / W0 copies
            ]),
        compiler_params=pltpu.CompilerParams(
            dimension_semantics=("arbitrary",), **vmem_kwargs),
    )(thetas, x_p, w0_p, b0_p, adj_p, wconv_p, w1_p, b1_p)

    return out_pad[:n, :nhidden]


# ----------------------------------------------------------------------------
# Pure-JAX references
# ----------------------------------------------------------------------------
def deepgcn_reference(x, adj, params, *, lamda, alpha, variant):
    """Exact f32 mirror of the PyTorch forward (inference mode)."""
    h = jax.nn.relu(x @ params["fc0_w"] + params["fc0_b"])
    h0 = h
    for i, w in enumerate(params["conv_ws"]):
        theta = min(1.0, math.log(lamda / (i + 1) + 1.0))
        hi = adj @ h
        if variant:
            support = jnp.concatenate([hi, h0], axis=1)
            r = (1.0 - alpha) * hi + alpha * h0
        else:
            support = (1.0 - alpha) * hi + alpha * h0
            r = support
        h = jax.nn.relu(theta * (support @ w) + (1.0 - theta) * r + h)
    return h @ params["fc1_w"] + params["fc1_b"]


def deepgcn_reference_bf16(x, adj, params, *, lamda, alpha, variant):
    """Reference applying the same bf16 matmul-input quantization as the kernel."""
    bf = jnp.bfloat16

    def mm(a, b):
        return jnp.dot(a.astype(bf), b.astype(bf),
                       preferred_element_type=jnp.float32)

    h = jax.nn.relu(mm(x, params["fc0_w"]) + params["fc0_b"])
    h0 = h
    nh = h.shape[1]
    for i, w in enumerate(params["conv_ws"]):
        theta = min(1.0, math.log(lamda / (i + 1) + 1.0))
        hi = mm(adj, h)
        if variant:
            sw = mm(hi, w[:nh]) + mm(h0, w[nh:])
            r = (1.0 - alpha) * hi + alpha * h0
        else:
            support = (1.0 - alpha) * hi + alpha * h0
            sw = mm(support, w)
            r = support
        h = jax.nn.relu(theta * sw + (1.0 - theta) * r + h)
    return mm(h, params["fc1_w"]) + params["fc1_b"]


# ----------------------------------------------------------------------------
# Deterministic parameter init (shapes from deepGCN.__init__)
# ----------------------------------------------------------------------------
def init_params(key, *, nlayers, nfeat, nhidden, variant):
    keys = jax.random.split(key, 4 + nlayers)
    k0 = 1.0 / math.sqrt(nfeat)
    fc0_w = jax.random.uniform(keys[0], (nfeat, nhidden), jnp.float32, -k0, k0)
    fc0_b = jax.random.uniform(keys[1], (1, nhidden), jnp.float32, -k0, k0)
    k1 = 1.0 / math.sqrt(nhidden)
    fc1_w = jax.random.uniform(keys[2], (nhidden, nhidden), jnp.float32, -k1, k1)
    fc1_b = jax.random.uniform(keys[3], (1, nhidden), jnp.float32, -k1, k1)
    in_f = 2 * nhidden if variant else nhidden
    stdv = 1.0 / math.sqrt(nhidden)
    conv_ws = [
        jax.random.uniform(keys[4 + i], (in_f, nhidden), jnp.float32, -stdv, stdv)
        for i in range(nlayers)
    ]
    return {"fc0_w": fc0_w, "fc0_b": fc0_b,
            "fc1_w": fc1_w, "fc1_b": fc1_b,
            "conv_ws": conv_ws}


# ----------------------------------------------------------------------------
if __name__ == "__main__":
    # Protein-graph-like sizes kept small; N padded to 384 -> 3 row tiles,
    # so the tiled inner loop is exercised, and depth 8 validates bf16 drift.
    N = 300          # graph nodes (protein sequence length)
    NFEAT = 54       # input feature dim (PSSM + HMM + DSSP)
    NHIDDEN = 64     # hidden dim
    NLAYERS = 8
    LAMDA = 0.5
    ALPHA = 0.1

    key = jax.random.PRNGKey(0)
    kx, kadj, kp1, kp2 = jax.random.split(key, 4)

    x = jax.random.normal(kx, (N, NFEAT), jnp.float32)
    a = jax.random.uniform(kadj, (N, N), jnp.float32)
    adj = (a + a.T) / (2.0 * N)   # dense symmetric "normalized adjacency"

    for variant, kp in ((True, kp1), (False, kp2)):
        params = init_params(kp, nlayers=NLAYERS, nfeat=NFEAT,
                             nhidden=NHIDDEN, variant=variant)

        out = deepgcn_forward(x, adj, params, lamda=LAMDA, alpha=ALPHA,
                              variant=variant)
        out = jax.block_until_ready(out)
        assert out.shape == (N, NHIDDEN)

        # Structural check: identical bf16-quantized math, tight tolerance.
        ref_bf = deepgcn_reference_bf16(x, adj, params, lamda=LAMDA,
                                        alpha=ALPHA, variant=variant)
        assert jnp.allclose(out, ref_bf, atol=2e-3, rtol=2e-3), \
            f"kernel vs bf16-sim reference mismatch (variant={variant})"

        # Drift check vs pure-f32 PyTorch-equivalent reference: tolerance only
        # reflects bf16 matmul-input quantization across 8 layers (f32 accum);
        # the tight correctness gate is the bf16-sim check above.
        ref_f32 = deepgcn_reference(x, adj, params, lamda=LAMDA,
                                    alpha=ALPHA, variant=variant)
        assert jnp.allclose(out, ref_f32, atol=1e-1, rtol=1e-1), \
            f"kernel vs f32 reference drift too large (variant={variant})"

    print("KERNEL_OK")
</pallas_src>

<mosaic_0001>
module attributes {stable_mosaic.version = 11 : i64} {
  func.func @_deepgcn_fused_kernel(%arg0: i32, %arg1: memref<8xf32, #tpu.memory_space<smem>>, %arg2: memref<384x128xbf16, #tpu.memory_space<any>>, %arg3: memref<128x128xbf16, #tpu.memory_space<any>>, %arg4: memref<1x128xf32, #tpu.memory_space<vmem>>, %arg5: memref<384x384xbf16, #tpu.memory_space<any>>, %arg6: memref<1x256x128xbf16, #tpu.memory_space<vmem>>, %arg7: memref<128x128xbf16, #tpu.memory_space<vmem>>, %arg8: memref<1x128xf32, #tpu.memory_space<vmem>>, %arg9: memref<384x128xf32, #tpu.memory_space<vmem>>, %arg10: memref<384x384xbf16, #tpu.memory_space<vmem>>, %arg11: memref<384x128xf32, #tpu.memory_space<vmem>>, %arg12: memref<384x128xf32, #tpu.memory_space<vmem>>, %arg13: memref<384x128xf32, #tpu.memory_space<vmem>>, %arg14: memref<3x!tpu.dma_semaphore, #tpu.memory_space<semaphore_mem>>) attributes {dimension_semantics = [#tpu.dimension_semantics<arbitrary>], iteration_bounds = array<i64: 8>, scalar_prefetch = 0 : i64, scratch_operands = 5 : i64, tpu.core_type = #tpu.core_type<tc>, window_params = [{transform_indices = @transform_0, window_bounds = array<i64: 8>}, {}, {}, {pipeline_mode = #tpu.pipeline_mode<synchronous>, transform_indices = @transform_3, window_bounds = array<i64: 1, 128>}, {}, {transform_indices = @transform_5, window_bounds = array<i64: 1, 256, 128>}, {pipeline_mode = #tpu.pipeline_mode<synchronous>, transform_indices = @transform_6, window_bounds = array<i64: 128, 128>}, {pipeline_mode = #tpu.pipeline_mode<synchronous>, transform_indices = @transform_7, window_bounds = array<i64: 1, 128>}, {pipeline_mode = #tpu.pipeline_mode<synchronous>, transform_indices = @transform_8, window_bounds = array<i64: 384, 128>}]} {
    %c0_i32 = arith.constant 0 : i32
    %0 = arith.cmpi eq, %arg0, %c0_i32 : i32
    %1 = arith.extui %0 : i1 to i32
    %c0_i32_0 = arith.constant 0 : i32
    %2 = arith.cmpi ne, %1, %c0_i32_0 : i32
    scf.if %2 {
      %c0_i32_9 = arith.constant 0 : i32
      %14 = tpu.memref_slice %arg14[%c0_i32_9] : memref<3x!tpu.dma_semaphore, #tpu.memory_space<semaphore_mem>> -> memref<1x!tpu.dma_semaphore, #tpu.memory_space<semaphore_mem>>
      %15 = tpu.memref_squeeze %14 : memref<1x!tpu.dma_semaphore, #tpu.memory_space<semaphore_mem>> -> memref<!tpu.dma_semaphore, #tpu.memory_space<semaphore_mem>>
      tpu.enqueue_dma source(%arg5 : memref<384x384xbf16, #tpu.memory_space<any>>) target(%arg10 : memref<384x384xbf16, #tpu.memory_space<vmem>>) target_semaphore(%15 : memref<!tpu.dma_semaphore, #tpu.memory_space<semaphore_mem>>)
      "tpu.region"() ({
        %alloca = memref.alloca() : memref<384x128xbf16, #tpu.memory_space<vmem>>
        %alloca_11 = memref.alloca() : memref<128x128xbf16, #tpu.memory_space<vmem>>
        %c1_i32_12 = arith.constant 1 : i32
        %18 = tpu.memref_slice %arg14[%c1_i32_12] : memref<3x!tpu.dma_semaphore, #tpu.memory_space<semaphore_mem>> -> memref<1x!tpu.dma_semaphore, #tpu.memory_space<semaphore_mem>>
        %19 = tpu.memref_squeeze %18 : memref<1x!tpu.dma_semaphore, #tpu.memory_space<semaphore_mem>> -> memref<!tpu.dma_semaphore, #tpu.memory_space<semaphore_mem>>
        tpu.enqueue_dma source(%arg2 : memref<384x128xbf16, #tpu.memory_space<any>>) target(%alloca : memref<384x128xbf16, #tpu.memory_space<vmem>>) target_semaphore(%19 : memref<!tpu.dma_semaphore, #tpu.memory_space<semaphore_mem>>)
        %c2_i32 = arith.constant 2 : i32
        %20 = tpu.memref_slice %arg14[%c2_i32] : memref<3x!tpu.dma_semaphore, #tpu.memory_space<semaphore_mem>> -> memref<1x!tpu.dma_semaphore, #tpu.memory_space<semaphore_mem>>
        %21 = tpu.memref_squeeze %20 : memref<1x!tpu.dma_semaphore, #tpu.memory_space<semaphore_mem>> -> memref<!tpu.dma_semaphore, #tpu.memory_space<semaphore_mem>>
        tpu.enqueue_dma source(%arg3 : memref<128x128xbf16, #tpu.memory_space<any>>) target(%alloca_11 : memref<128x128xbf16, #tpu.memory_space<vmem>>) target_semaphore(%21 : memref<!tpu.dma_semaphore, #tpu.memory_space<semaphore_mem>>)
        %c1_i32_13 = arith.constant 1 : i32
        %22 = tpu.memref_slice %arg14[%c1_i32_13] : memref<3x!tpu.dma_semaphore, #tpu.memory_space<semaphore_mem>> -> memref<1x!tpu.dma_semaphore, #tpu.memory_space<semaphore_mem>>
        %23 = tpu.memref_squeeze %22 : memref<1x!tpu.dma_semaphore, #tpu.memory_space<semaphore_mem>> -> memref<!tpu.dma_semaphore, #tpu.memory_space<semaphore_mem>>
        tpu.wait_dma2 semaphore(%23 : memref<!tpu.dma_semaphore, #tpu.memory_space<semaphore_mem>>) src(%arg2 : memref<384x128xbf16, #tpu.memory_space<any>>) dst(%alloca : memref<384x128xbf16, #tpu.memory_space<vmem>>)
        %c2_i32_14 = arith.constant 2 : i32
        %24 = tpu.memref_slice %arg14[%c2_i32_14] : memref<3x!tpu.dma_semaphore, #tpu.memory_space<semaphore_mem>> -> memref<1x!tpu.dma_semaphore, #tpu.memory_space<semaphore_mem>>
        %25 = tpu.memref_squeeze %24 : memref<1x!tpu.dma_semaphore, #tpu.memory_space<semaphore_mem>> -> memref<!tpu.dma_semaphore, #tpu.memory_space<semaphore_mem>>
        tpu.wait_dma2 semaphore(%25 : memref<!tpu.dma_semaphore, #tpu.memory_space<semaphore_mem>>) src(%arg3 : memref<128x128xbf16, #tpu.memory_space<any>>) dst(%alloca_11 : memref<128x128xbf16, #tpu.memory_space<vmem>>)
        %c0_15 = arith.constant 0 : index
        %c0_16 = arith.constant 0 : index
        %26 = vector.load %alloca[%c0_15, %c0_16] : memref<384x128xbf16, #tpu.memory_space<vmem>>, vector<384x128xbf16>
        %c0_17 = arith.constant 0 : index
        %c0_18 = arith.constant 0 : index
        %27 = vector.load %alloca_11[%c0_17, %c0_18] : memref<128x128xbf16, #tpu.memory_space<vmem>>, vector<128x128xbf16>
        %cst_19 = arith.constant dense<0.000000e+00> : vector<384x128xf32>
        %28 = tpu.matmul %26, %27, %cst_19 {dimension_numbers = #tpu.dot_dimension_numbers<[1], [0], [0], [1], [0, 0, 1, 1], [], []>} : vector<384x128xbf16>, vector<128x128xbf16>, vector<384x128xf32> -> vector<384x128xf32>
        %c0_20 = arith.constant 0 : index
        %c0_21 = arith.constant 0 : index
        %29 = vector.load %arg4[%c0_20, %c0_21] : memref<1x128xf32, #tpu.memory_space<vmem>>, vector<1x128xf32>
        %30 = vector.broadcast %29 : vector<1x128xf32> to vector<384x128xf32>
        %31 = arith.addf %28, %30 : vector<384x128xf32>
        %cst_22 = arith.constant 0.000000e+00 : f32
        %32 = vector.broadcast %cst_22 : f32 to vector<384x128xf32>
        %33 = arith.maximumf %31, %32 : vector<384x128xf32>
        %c0_23 = arith.constant 0 : index
        %c0_24 = arith.constant 0 : index
        %34 = vector.load %arg11[%c0_23, %c0_24] : memref<384x128xf32, #tpu.memory_space<vmem>>, vector<384x128xf32>
        tpu.vector_store %arg11[%c0_23, %c0_24], %33 {strides = array<i32>} : memref<384x128xf32, #tpu.memory_space<vmem>>, vector<384x128xf32>,
        %c0_25 = arith.constant 0 : index
        %c0_26 = arith.constant 0 : index
        %35 = vector.load %arg12[%c0_25, %c0_26] : memref<384x128xf32, #tpu.memory_space<vmem>>, vector<384x128xf32>
        tpu.vector_store %arg12[%c0_25, %c0_26], %33 {strides = array<i32>} : memref<384x128xf32, #tpu.memory_space<vmem>>, vector<384x128xf32>,
        tpu.yield
      }) : () -> ()
      %c0_i32_10 = arith.constant 0 : i32
      %16 = tpu.memref_slice %arg14[%c0_i32_10] : memref<3x!tpu.dma_semaphore, #tpu.memory_space<semaphore_mem>> -> memref<1x!tpu.dma_semaphore, #tpu.memory_space<semaphore_mem>>
      %17 = tpu.memref_squeeze %16 : memref<1x!tpu.dma_semaphore, #tpu.memory_space<semaphore_mem>> -> memref<!tpu.dma_semaphore, #tpu.memory_space<semaphore_mem>>
      tpu.wait_dma2 semaphore(%17 : memref<!tpu.dma_semaphore, #tpu.memory_space<semaphore_mem>>) src(%arg5 : memref<384x384xbf16, #tpu.memory_space<any>>) dst(%arg10 : memref<384x384xbf16, #tpu.memory_space<vmem>>)
    } else {
    }
    %3 = arith.index_cast %arg0 : i32 to index
    %4 = memref.load %arg1[%3] : memref<8xf32, #tpu.memory_space<smem>>
    %cst = arith.constant 1.000000e+00 : f32
    %5 = arith.subf %cst, %4 : f32
    %c0 = arith.constant 0 : index
    %c0_1 = arith.constant 0 : index
    %6 = vector.load %arg11[%c0, %c0_1] : memref<384x128xf32, #tpu.memory_space<vmem>>, vector<384x128xf32>
    %7 = arith.truncf %6 : vector<384x128xf32> to vector<384x128xbf16>
    %c0_i32_2 = arith.constant 0 : i32
    %c3_i32 = arith.constant 3 : i32
    %8 = arith.addi %c0_i32_2, %c3_i32 : i32
    %c1_i32 = arith.constant 1 : i32
    scf.for %arg15 = %c0_i32_2 to %8 step %c1_i32  : i32 {
      %c128_i32 = arith.constant 128 : i32
      %14 = arith.muli %arg15, %c128_i32 : i32
      %15 = tpu.assume_multiple %14, 128 : i32
      %16 = arith.index_cast %15 : i32 to index
      %c0_9 = arith.constant 0 : index
      %17 = vector.load %arg10[%16, %c0_9] : memref<384x384xbf16, #tpu.memory_space<vmem>>, vector<128x384xbf16>
      %cst_10 = arith.constant dense<0.000000e+00> : vector<128x128xf32>
      %18 = tpu.matmul %17, %7, %cst_10 {dimension_numbers = #tpu.dot_dimension_numbers<[1], [0], [0], [1], [0, 0, 1, 1], [], []>} : vector<128x384xbf16>, vector<384x128xbf16>, vector<128x128xf32> -> vector<128x128xf32>
      %19 = arith.index_cast %15 : i32 to index
      %c0_11 = arith.constant 0 : index
      %20 = vector.load %arg12[%19, %c0_11] : memref<384x128xf32, #tpu.memory_space<vmem>>, vector<128x128xf32>
      %21 = arith.truncf %18 : vector<128x128xf32> to vector<128x128xbf16>
      %c0_12 = arith.constant 0 : index
      %c0_13 = arith.constant 0 : index
      %c0_14 = arith.constant 0 : index
      %22 = vector.load %arg6[%c0_12, %c0_13, %c0_14] : memref<1x256x128xbf16, #tpu.memory_space<vmem>>, vector<1x128x128xbf16>
      %23 = vector.shape_cast %22 : vector<1x128x128xbf16> to vector<128x128xbf16>
      %cst_15 = arith.constant dense<0.000000e+00> : vector<128x128xf32>
      %24 = tpu.matmul %21, %23, %cst_15 {dimension_numbers = #tpu.dot_dimension_numbers<[1], [0], [0], [1], [0, 0, 1, 1], [], []>} : vector<128x128xbf16>, vector<128x128xbf16>, vector<128x128xf32> -> vector<128x128xf32>
      %25 = arith.truncf %20 : vector<128x128xf32> to vector<128x128xbf16>
      %c0_16 = arith.constant 0 : index
      %c128 = arith.constant 128 : index
      %c0_17 = arith.constant 0 : index
      %26 = vector.load %arg6[%c0_16, %c128, %c0_17] : memref<1x256x128xbf16, #tpu.memory_space<vmem>>, vector<1x128x128xbf16>
      %27 = vector.shape_cast %26 : vector<1x128x128xbf16> to vector<128x128xbf16>
      %cst_18 = arith.constant dense<0.000000e+00> : vector<128x128xf32>
      %28 = tpu.matmul %25, %27, %cst_18 {dimension_numbers = #tpu.dot_dimension_numbers<[1], [0], [0], [1], [0, 0, 1, 1], [], []>} : vector<128x128xbf16>, vector<128x128xbf16>, vector<128x128xf32> -> vector<128x128xf32>
      %29 = arith.addf %24, %28 : vector<128x128xf32>
      %cst_19 = arith.constant 0.899999976 : f32
      %30 = vector.broadcast %cst_19 : f32 to vector<128x128xf32>
      %31 = arith.mulf %30, %18 : vector<128x128xf32>
      %cst_20 = arith.constant 1.000000e-01 : f32
      %32 = vector.broadcast %cst_20 : f32 to vector<128x128xf32>
      %33 = arith.mulf %32, %20 : vector<128x128xf32>
      %34 = arith.addf %31, %33 : vector<128x128xf32>
      %35 = vector.broadcast %4 : f32 to vector<128x128xf32>
      %36 = arith.mulf %35, %29 : vector<128x128xf32>
      %37 = vector.broadcast %5 : f32 to vector<128x128xf32>
      %38 = arith.mulf %37, %34 : vector<128x128xf32>
      %39 = arith.addf %36, %38 : vector<128x128xf32>
      %40 = arith.index_cast %15 : i32 to index
      %c0_21 = arith.constant 0 : index
      %41 = vector.load %arg11[%40, %c0_21] : memref<384x128xf32, #tpu.memory_space<vmem>>, vector<128x128xf32>
      %42 = arith.addf %39, %41 : vector<128x128xf32>
      %cst_22 = arith.constant 0.000000e+00 : f32
      %43 = vector.broadcast %cst_22 : f32 to vector<128x128xf32>
      %44 = arith.maximumf %42, %43 : vector<128x128xf32>
      %45 = arith.index_cast %15 : i32 to index
      %c0_23 = arith.constant 0 : index
      %46 = vector.load %arg13[%45, %c0_23] : memref<384x128xf32, #tpu.memory_space<vmem>>, vector<128x128xf32>
      tpu.vector_store %arg13[%45, %c0_23], %44 {strides = array<i32>} : memref<384x128xf32, #tpu.memory_space<vmem>>, vector<128x128xf32>,
    }
    %c3_i32_3 = arith.constant 3 : i32
    %c0_4 = arith.constant 0 : index
    %c0_5 = arith.constant 0 : index
    %9 = vector.load %arg13[%c0_4, %c0_5] : memref<384x128xf32, #tpu.memory_space<vmem>>, vector<384x128xf32>
    %c0_6 = arith.constant 0 : index
    %c0_7 = arith.constant 0 : index
    %10 = vector.load %arg11[%c0_6, %c0_7] : memref<384x128xf32, #tpu.memory_space<vmem>>, vector<384x128xf32>
    tpu.vector_store %arg11[%c0_6, %c0_7], %9 {strides = array<i32>} : memref<384x128xf32, #tpu.memory_space<vmem>>, vector<384x128xf32>,
    %c7_i32 = arith.constant 7 : i32
    %11 = arith.cmpi eq, %arg0, %c7_i32 : i32
    %12 = arith.extui %11 : i1 to i32
    %c0_i32_8 = arith.constant 0 : i32
    %13 = arith.cmpi ne, %12, %c0_i32_8 : i32
    scf.if %13 {
      %c0_9 = arith.constant 0 : index
      %c0_10 = arith.constant 0 : index
      %14 = vector.load %arg11[%c0_9, %c0_10] : memref<384x128xf32, #tpu.memory_space<vmem>>, vector<384x128xf32>
      %15 = arith.truncf %14 : vector<384x128xf32> to vector<384x128xbf16>
      %c0_11 = arith.constant 0 : index
      %c0_12 = arith.constant 0 : index
      %16 = vector.load %arg7[%c0_11, %c0_12] : memref<128x128xbf16, #tpu.memory_space<vmem>>, vector<128x128xbf16>
      %cst_13 = arith.constant dense<0.000000e+00> : vector<384x128xf32>
      %17 = tpu.matmul %15, %16, %cst_13 {dimension_numbers = #tpu.dot_dimension_numbers<[1], [0], [0], [1], [0, 0, 1, 1], [], []>} : vector<384x128xbf16>, vector<128x128xbf16>, vector<384x128xf32> -> vector<384x128xf32>
      %c0_14 = arith.constant 0 : index
      %c0_15 = arith.constant 0 : index
      %18 = vector.load %arg8[%c0_14, %c0_15] : memref<1x128xf32, #tpu.memory_space<vmem>>, vector<1x128xf32>
      %19 = vector.broadcast %18 : vector<1x128xf32> to vector<384x128xf32>
      %20 = arith.addf %17, %19 : vector<384x128xf32>
      %c0_16 = arith.constant 0 : index
      %c0_17 = arith.constant 0 : index
      %21 = vector.load %arg9[%c0_16, %c0_17] : memref<384x128xf32, #tpu.memory_space<vmem>>, vector<384x128xf32>
      tpu.vector_store %arg9[%c0_16, %c0_17], %20 {strides = array<i32>} : memref<384x128xf32, #tpu.memory_space<vmem>>, vector<384x128xf32>,
    } else {
    }
    return
  }
  func.func @transform_0(%arg0: i32) -> i32 {
    %c0_i32 = arith.constant 0 : i32
    %c0_i32_0 = arith.constant 0 : i32
    return %c0_i32 : i32
  }
  func.func @transform_3(%arg0: i32) -> (i32, i32) {
    %c0_i32 = arith.constant 0 : i32
    %c0_i32_0 = arith.constant 0 : i32
    %c0_i32_1 = arith.constant 0 : i32
    return %c0_i32, %c0_i32_0 : i32, i32
  }
  func.func @transform_5(%arg0: i32) -> (i32, i32, i32) {
    %c0_i32 = arith.constant 0 : i32
    %c0_i32_0 = arith.constant 0 : i32
    %c0_i32_1 = arith.constant 0 : i32
    return %arg0, %c0_i32, %c0_i32_0 : i32, i32, i32
  }
  func.func @transform_6(%arg0: i32) -> (i32, i32) {
    %c0_i32 = arith.constant 0 : i32
    %c0_i32_0 = arith.constant 0 : i32
    %c0_i32_1 = arith.constant 0 : i32
    return %c0_i32, %c0_i32_0 : i32, i32
  }
  func.func @transform_7(%arg0: i32) -> (i32, i32) {
    %c0_i32 = arith.constant 0 : i32
    %c0_i32_0 = arith.constant 0 : i32
    %c0_i32_1 = arith.constant 0 : i32
    return %c0_i32, %c0_i32_0 : i32, i32
  }
  func.func @transform_8(%arg0: i32) -> (i32, i32) {
    %c0_i32 = arith.constant 0 : i32
    %c0_i32_0 = arith.constant 0 : i32
    %c0_i32_1 = arith.constant 0 : i32
    return %c0_i32, %c0_i32_0 : i32, i32
  }
}

</mosaic_0001>

<llo_original>
// kernel: tpu_custom_call.1
$region0: #{tpu_custom_call.1}
  #allocation0 [shape = 'u32[]', space=smem, size = 0x4, offset = 0x4, fixed_abs, tag = 'smem constant byte address 0x4 - core index']
  #allocation1 [shape = 'u32[144,128]{1,0:T(1,128)}', space=vmem, size = 0x12000, scoped, tag = 'internal scratch']
  #allocation2 [shape = 'bf16[384,384]{1,0:T(8,128)(2,1)}', space=vmem, size = 0x48000, scoped, tag = 'scratch operand']
  #allocation3 [shape = 'f32[384,128]{1,0:T(8,128)}', space=vmem, size = 0x30000, scoped, tag = 'scratch operand']
  #allocation4 [shape = 'f32[384,128]{1,0:T(8,128)}', space=vmem, size = 0x30000, scoped, tag = 'scratch operand']
  #allocation5 [shape = 'f32[384,128]{1,0:T(8,128)}', space=vmem, size = 0x30000, scoped, tag = 'scratch operand']
  #allocation6 [shape = 's32[3]{0}', space=sflag, size = 0xc, scoped, tag = 'scratch operand']
  #allocation15 [shape = 's32[]', space=sflag, size = 0x4, offset = 0, fixed_abs, tag = 'sflag constant byte address 0x0 - dummy sync flag']
  #allocation16 [shape = 's32[]', space=sflag, size = 0x4, offset = 0, fixed_abs, tag = 'sflag constant byte address 0x0 - dummy sync flag']
  #allocation17 [shape = 'u32[]', space=smem, size = 0x4, offset = 0x44, fixed_abs, tag = 'smem constant byte address 0x44 - assertion arg 0']
  #allocation18 [shape = 'u32[]', space=smem, size = 0x4, offset = 0x48, fixed_abs, tag = 'smem constant byte address 0x48 - assertion arg 1']
  #allocation21 [shape = 's32[]', space=sflag, size = 0x4, offset = 0, fixed_abs, tag = 'sflag constant byte address 0x0 - dummy sync flag']
  #allocation22 [shape = 's32[]', space=sflag, size = 0x4, offset = 0, fixed_abs, tag = 'sflag constant byte address 0x0 - dummy sync flag']
  #allocation23 [shape = 's32[]', space=sflag, size = 0x4, offset = 0, fixed_abs, tag = 'sflag constant byte address 0x0 - dummy sync flag']
  #allocation24 [shape = 's32[]', space=sflag, size = 0x4, offset = 0, fixed_abs, tag = 'sflag constant byte address 0x0 - dummy sync flag']
  %s0 = inlined_call_operand.hbm [shape: f32[8], index: 0, kind: input, shape index: {}]
  %s1 = inlined_call_operand.hbm [shape: bf16[384,128], index: 1, kind: input, shape index: {}]
  %s2 = inlined_call_operand.hbm [shape: bf16[128,128], index: 2, kind: input, shape index: {}]
  %s3 = inlined_call_operand.vmem [shape: f32[1,128], index: 3, kind: input, shape index: {}]
  %s4 = inlined_call_operand.hbm [shape: bf16[384,384], index: 4, kind: input, shape index: {}]
  %s5 = inlined_call_operand.hbm [shape: bf16[8,256,128], index: 5, kind: input, shape index: {}]
  %s6 = inlined_call_operand.hbm [shape: bf16[128,128], index: 6, kind: input, shape index: {}]
  %s7 = inlined_call_operand.vmem [shape: f32[1,128], index: 7, kind: input, shape index: {}]
  %s8 = inlined_call_operand.hbm [shape: f32[384,128], index: 8, kind: output, shape index: {}]
  %s9 = sld [smem:[#allocation0]]
  $region93: #{tpu_custom_call.1} parent=0
    _
  %s11 = ssub.s32 1, %s9
  %s12 = scalar_select 0, %s11, %s9
  $region1: #{tpu_custom_call.1} parent=0
    #allocation7 [shape = 'u8[512]{0}', space=smem, size = 0x200, scoped, tag = 'input window, operand 0, single buffered']
    #allocation8 [shape = 's32[2]{0}', space=sflag, size = 0x8, scoped, tag = 'scoped memory for tpu_custom_call.1']
    #allocation9 [shape = 's32[2]{0}', space=sflag, size = 0x8, scoped, tag = 'scoped memory for tpu_custom_call.1']
    #allocation10 [shape = 's32[2]{0}', space=sflag, size = 0x8, scoped, tag = 'scoped memory for tpu_custom_call.1']
    #allocation11 [shape = 'u8[131072]{0}', space=vmem, size = 0x20000, scoped, tag = 'input window, operand 5']
    #allocation12 [shape = 'u8[32768]{0}', space=vmem, size = 0x8000, scoped, tag = 'input window, operand 6, single buffered']
    #allocation13 [shape = 's32[1]{0}', space=sflag, size = 0x4, scoped, tag = 'scoped memory for tpu_custom_call.1']
    #allocation14 [shape = 'u8[196608]{0}', space=vmem, size = 0x30000, scoped, tag = 'output window, operand 0, single buffered']
    %13 = vsyncpa [#allocation10], 0
    %14 = vsyncpa [#allocation8], 0
    %s15 = scalar_lea.sflag [#allocation8], 1
    %16 = vsyncpa %s15, 0
    %17 = vsyncpa [#allocation13], 0
    %18 = vsyncpa [#allocation9], 0
    loop: start=0, step=1, limit=10
    $region2: #{tpu_custom_call.1} parent=1 // loop_pre_header
      _
    $region3: #{tpu_custom_call.1} parent=1 // loop_header
      %s20 = sphi 0, %s24
      %p21 = scmp.ge.s32.totalorder %s20, 10
      %s28 = sphi 0, %s28
      %s30 = sphi 0, %s28
      %s31 = sphi 0, %s30
      %s45 = sphi 0, %s31
      %s49 = sphi 0, %s49
      %s51 = sphi 0, %s49
      %s52 = sphi 0, %s51
      %s66 = sphi 0, %s52
      %s72 = sphi 0, %s74
      %s75 = sphi 0, %s72
      %s76 = sphi 0, %s75
      %s92 = sphi 0, %s76
      %s96 = sphi 0, %s96
      %s98 = sphi 0, %s96
      %s99 = sphi 0, %s98
      %s113 = sphi 0, %s99
      %s117 = sphi 0, %s117
      %s119 = sphi 0, %s117
      %s120 = sphi 0, %s119
      %s134 = sphi 0, %s120
      %s138 = sphi 0, %s138
      %s140 = sphi 0, %s138
      %s141 = sphi 0, %s140
      %s155 = sphi 0, %s141
    $region4: #{tpu_custom_call.1} parent=1 // loop_header_branch
      %23 = sbr.rel (%p21) target = $region8
    $region5: #{tpu_custom_call.1} parent=1 // loop_body
      %s25 = ssub.s32 %s20, 1
      %s26 = ssub.s32 %s20, 2
      %s27 = sadd.s32 %s20, 1
      %s29 = sadd.s32 %s28, 1
      %p32 = scmp.eq.s32.totalorder %s20, 7
      %p33 = scmp.ne.s32.totalorder %s28, %s30
      %p34 = scmp.eq.s32.totalorder %s20, 0
      %p35 = por %p33, %p34
      %p36 = scmp.ne.s32.totalorder %s28, %s30
      %p37 = scmp.eq.s32.totalorder %s25, 7
      %p38 = por %p36, %p37
      %p39 = scmp.ne.s32.totalorder %s30, %s31
      %p40 = scmp.eq.s32.totalorder %s25, 0
      %p41 = por %p39, %p40
      %p42 = scmp.ne.s32.totalorder %s30, %s31
      %p43 = scmp.eq.s32.totalorder %s26, 7
      %p44 = por %p42, %p43
      %p46 = scmp.ne.s32.totalorder %s31, %s45
      %p47 = scmp.eq.s32.totalorder %s26, 0
      %p48 = por %p46, %p47
      %s50 = sadd.s32 %s49, 1
      %p53 = scmp.eq.s32.totalorder %s20, 7
      %p54 = scmp.ne.s32.totalorder %s49, %s51
      %p55 = scmp.eq.s32.totalorder %s20, 0
      %p56 = por %p54, %p55
      %p57 = scmp.ne.s32.totalorder %s49, %s51
      %p58 = scmp.eq.s32.totalorder %s25, 7
      %p59 = por %p57, %p58
      %p60 = scmp.ne.s32.totalorder %s51, %s52
      %p61 = scmp.eq.s32.totalorder %s25, 0
      %p62 = por %p60, %p61
      %p63 = scmp.ne.s32.totalorder %s51, %s52
      %p64 = scmp.eq.s32.totalorder %s26, 7
      %p65 = por %p63, %p64
      %p67 = scmp.ne.s32.totalorder %s52, %s66
      %p68 = scmp.eq.s32.totalorder %s26, 0
      %p69 = por %p67, %p68
      %s70 = ssub.s32 %s20, %s27
      %p71 = scmp.eq.s32.totalorder %s70, 0
      %s73 = sadd.s32 %s72, 1
      %s74 = scalar_select %p71, %s72, %s73
      %p77 = pneg %p71
      %p78 = scmp.eq.s32.totalorder %s20, 7
      %p79 = por %p77, %p78
      %p80 = scmp.ne.s32.totalorder %s72, %s75
      %p81 = scmp.eq.s32.totalorder %s20, 0
      %p82 = por %p80, %p81
      %p83 = scmp.ne.s32.totalorder %s72, %s75
      %p84 = scmp.eq.s32.totalorder %s25, 7
      %p85 = por %p83, %p84
      %p86 = scmp.ne.s32.totalorder %s75, %s76
      %p87 = scmp.eq.s32.totalorder %s25, 0
      %p88 = por %p86, %p87
      %p89 = scmp.ne.s32.totalorder %s75, %s76
      %p90 = scmp.eq.s32.totalorder %s26, 7
      %p91 = por %p89, %p90
      %p93 = scmp.ne.s32.totalorder %s76, %s92
      %p94 = scmp.eq.s32.totalorder %s26, 0
      %p95 = por %p93, %p94
      %s97 = sadd.s32 %s96, 1
      %p100 = scmp.eq.s32.totalorder %s20, 7
      %p101 = scmp.ne.s32.totalorder %s96, %s98
      %p102 = scmp.eq.s32.totalorder %s20, 0
      %p103 = por %p101, %p102
      %p104 = scmp.ne.s32.totalorder %s96, %s98
      %p105 = scmp.eq.s32.totalorder %s25, 7
      %p106 = por %p104, %p105
      %p107 = scmp.ne.s32.totalorder %s98, %s99
      %p108 = scmp.eq.s32.totalorder %s25, 0
      %p109 = por %p107, %p108
      %p110 = scmp.ne.s32.totalorder %s98, %s99
      %p111 = scmp.eq.s32.totalorder %s26, 7
      %p112 = por %p110, %p111
      %p114 = scmp.ne.s32.totalorder %s99, %s113
      %p115 = scmp.eq.s32.totalorder %s26, 0
      %p116 = por %p114, %p115
      %s118 = sadd.s32 %s117, 1
      %p121 = scmp.eq.s32.totalorder %s20, 7
      %p122 = scmp.ne.s32.totalorder %s117, %s119
      %p123 = scmp.eq.s32.totalorder %s20, 0
      %p124 = por %p122, %p123
      %p125 = scmp.ne.s32.totalorder %s117, %s119
      %p126 = scmp.eq.s32.totalorder %s25, 7
      %p127 = por %p125, %p126
      %p128 = scmp.ne.s32.totalorder %s119, %s120
      %p129 = scmp.eq.s32.totalorder %s25, 0
      %p130 = por %p128, %p129
      %p131 = scmp.ne.s32.totalorder %s119, %s120
      %p132 = scmp.eq.s32.totalorder %s26, 7
      %p133 = por %p131, %p132
      %p135 = scmp.ne.s32.totalorder %s120, %s134
      %p136 = scmp.eq.s32.totalorder %s26, 0
      %p137 = por %p135, %p136
      %s139 = sadd.s32 %s138, 1
      %p142 = scmp.eq.s32.totalorder %s20, 7
      %p143 = scmp.ne.s32.totalorder %s138, %s140
      %p144 = scmp.eq.s32.totalorder %s20, 0
      %p145 = por %p143, %p144
      %p146 = scmp.ne.s32.totalorder %s138, %s140
      %p147 = scmp.eq.s32.totalorder %s25, 7
      %p148 = por %p146, %p147
      %p149 = scmp.ne.s32.totalorder %s140, %s141
      %p150 = scmp.eq.s32.totalorder %s25, 0
      %p151 = por %p149, %p150
      %p152 = scmp.ne.s32.totalorder %s140, %s141
      %p153 = scmp.eq.s32.totalorder %s26, 7
      %p154 = por %p152, %p153
      %p156 = scmp.ne.s32.totalorder %s141, %s155
      %p157 = scmp.eq.s32.totalorder %s26, 0
      %p158 = por %p156, %p157
      %p159 = scmp.le.s32.totalorder 1, %s20
      %p160 = scmp.lt.s32.totalorder %s20, 9
      %p161 = pnand %p159, %p160
      %p162 = pneg %p161
      // Predicated region
      $region9: #{tpu_custom_call.1} parent=5 // pred_check
        _
      $region10: #{tpu_custom_call.1} parent=5 // pred_check_branch
        %164 = sbr.rel (%p161) target = $region12
      $region11: #{tpu_custom_call.1} parent=5 // pred_region
        %s165 = ssub.s32 %s20, 1
        // Predicated region
        $region13: #{tpu_custom_call.1} parent=11 // pred_check
          %p166 = pneg %p41
        $region14: #{tpu_custom_call.1} parent=11 // pred_check_branch
          %168 = sbr.rel (%p166) target = $region16
        $region15: #{tpu_custom_call.1} parent=11 // pred_region
          %s170 = ssub.s32 16, 16
          %171 = vsyncadd [#allocation10], %s170
          %174 = dma.hbm_to_smem %s0, 16, [#allocation7], [#allocation10]
        $region16: #{tpu_custom_call.1} parent=11 // pred_fallthru
          _
        // Predicated region
        $region17: #{tpu_custom_call.1} parent=11 // pred_check
          %p175 = pneg %p62
        $region18: #{tpu_custom_call.1} parent=11 // pred_check_branch
          %177 = sbr.rel (%p175) target = $region20
        $region19: #{tpu_custom_call.1} parent=11 // pred_region
          _
        $region20: #{tpu_custom_call.1} parent=11 // pred_fallthru
          _
        // Predicated region
        $region21: #{tpu_custom_call.1} parent=11 // pred_check
          %p178 = pneg %p109
        $region22: #{tpu_custom_call.1} parent=11 // pred_check_branch
          %180 = sbr.rel (%p178) target = $region24
        $region23: #{tpu_custom_call.1} parent=11 // pred_region
          %s182 = ssub.s32 1024, 1024
          %183 = vsyncadd [#allocation13], %s182
          %s184 = sshll.u32 [#allocation12], 4
          %s185 = int_to_ptr.vmem [resolvable:$true] %s184
          %190 = dma.hbm_to_vmem [thread:$0]  %s6, 1024, %s185, [#allocation13], 64, 64, 4
        $region24: #{tpu_custom_call.1} parent=11 // pred_fallthru
          _
        // Predicated region
        $region25: #{tpu_custom_call.1} parent=11 // pred_check
          %p191 = pneg %p130
        $region26: #{tpu_custom_call.1} parent=11 // pred_check_branch
          %193 = sbr.rel (%p191) target = $region28
        $region27: #{tpu_custom_call.1} parent=11 // pred_region
          _
        $region28: #{tpu_custom_call.1} parent=11 // pred_fallthru
          _
      $region12: #{tpu_custom_call.1} parent=5 // pred_fallthru
        _
      %p194 = scmp.lt.s32.totalorder %s20, 8
      // Predicated region
      $region29: #{tpu_custom_call.1} parent=5 // pred_check
        %p195 = pneg %p194
      $region30: #{tpu_custom_call.1} parent=5 // pred_check_branch
        %197 = sbr.rel (%p195) target = $region32
      $region31: #{tpu_custom_call.1} parent=5 // pred_region
        // Predicated region
        $region33: #{tpu_custom_call.1} parent=31 // pred_check
          %p198 = pneg %p82
        $region34: #{tpu_custom_call.1} parent=31 // pred_check_branch
          %200 = sbr.rel (%p198) target = $region36
        $region35: #{tpu_custom_call.1} parent=31 // pred_region
          %s201 = sand.u32 %s72, 1
          %s202 = scalar_lea.sflag [#allocation8], %s201
          %s203 = sand.u32 %s72, 1
          %s204 = smul.addr %s203, 128
          %s205 = scalar_lea.vmem [#allocation11], %s204
          %s207 = ssub.s32 2048, 2048
          %208 = vsyncadd %s202, %s207
          %s209 = smul.addr %s20, 32
          %s210 = smul.addr %s209, 64
          %s211 = scalar_lea.hbm %s5, %s210
          %s212 = sshll.u32 %s205, 4
          %s213 = int_to_ptr.vmem [resolvable:$true] %s212
          %218 = dma.hbm_to_vmem [thread:$0]  %s211, 2048, %s213, %s202, 64, 64, 4
        $region36: #{tpu_custom_call.1} parent=31 // pred_fallthru
          _
      $region32: #{tpu_custom_call.1} parent=5 // pred_fallthru
        _
      %p219 = scmp.le.s32.totalorder 1, %s20
      %p220 = scmp.lt.s32.totalorder %s20, 9
      %p221 = pnand %p219, %p220
      %p222 = pneg %p221
      // Predicated region
      $region37: #{tpu_custom_call.1} parent=5 // pred_check
        _
      $region38: #{tpu_custom_call.1} parent=5 // pred_check_branch
        %224 = sbr.rel (%p221) target = $region40
      $region39: #{tpu_custom_call.1} parent=5 // pred_region
        %s225 = ssub.s32 %s20, 1
        // Predicated region
        $region41: #{tpu_custom_call.1} parent=39 // pred_check
          %p226 = pneg %p41
        $region42: #{tpu_custom_call.1} parent=39 // pred_check_branch
          %228 = sbr.rel (%p226) target = $region44
        $region43: #{tpu_custom_call.1} parent=39 // pred_region
          %229 = dma.done [#allocation10], 16
        $region44: #{tpu_custom_call.1} parent=39 // pred_fallthru
          _
        %s230 = sand.u32 %s75, 1
        %s231 = scalar_lea.sflag [#allocation8], %s230
        %s232 = sand.u32 %s75, 1
        %s233 = smul.addr %s232, 128
        %s234 = scalar_lea.vmem [#allocation11], %s233
        // Predicated region
        $region45: #{tpu_custom_call.1} parent=39 // pred_check
          %p235 = pneg %p88
        $region46: #{tpu_custom_call.1} parent=39 // pred_check_branch
          %237 = sbr.rel (%p235) target = $region48
        $region47: #{tpu_custom_call.1} parent=39 // pred_region
          %238 = dma.done %s231, 2048
        $region48: #{tpu_custom_call.1} parent=39 // pred_fallthru
          _
        // Predicated region
        $region49: #{tpu_custom_call.1} parent=39 // pred_check
          %p239 = pneg %p109
        $region50: #{tpu_custom_call.1} parent=39 // pred_check_branch
          %241 = sbr.rel (%p239) target = $region52
        $region51: #{tpu_custom_call.1} parent=39 // pred_region
          %242 = dma.done [#allocation13], 1024
        $region52: #{tpu_custom_call.1} parent=39 // pred_fallthru
          _
        %243 = sfence
        %p244 = pneg %p41
        %p245 = pneg %p38
        %p246 = pneg %p62
        %p247 = pneg %p59
        %s248 = sand.u32 %s75, 1
        %s249 = scalar_lea.sflag [#allocation8], %s248
        %s250 = sand.u32 %s75, 1
        %s251 = smul.addr %s250, 128
        %s252 = scalar_lea.vmem [#allocation11], %s251
        %p253 = pneg %p88
        %p254 = pneg %p85
        %p255 = pneg %p109
        %p256 = pneg %p106
        %p257 = pneg %p130
        %p258 = pneg %p127
        %p259 = pneg %p151
        %p260 = pneg %p148
        %p262 = scmp.eq.s32.totalorder %s25, 0
        // Predicated region
        $region53: #{tpu_custom_call.1} parent=39 // pred_check
          %p263 = pneg %p262
        $region54: #{tpu_custom_call.1} parent=39 // pred_check_branch
          %265 = sbr.rel (%p263) target = $region56
        $region55: #{tpu_custom_call.1} parent=39 // pred_region
          // Predicated region
          $region57: #{tpu_custom_call.1} parent=55 // pred_check
            _
          $region58: #{tpu_custom_call.1} parent=55 // pred_check_branch
            %267 = sbr.rel target = $region60
          $region59: #{tpu_custom_call.1} parent=55 // pred_region
            %268 = sst [smem:[#allocation17]] [#allocation16]
            %269 = sst [smem:[#allocation18]] [#allocation15]
          $region60: #{tpu_custom_call.1} parent=55 // pred_fallthru
            _
          %271 = shalt.err (0)
          %s273 = sshll.u32 [#allocation2], 4
          %s274 = int_to_ptr.vmem [resolvable:$true] %s273
          %276 = dma.hbm_to_vmem [thread:$0]  %s4, 9216, %s274, [#allocation6]
          $region61: #{tpu_custom_call.1} parent=55
            #allocation19 [shape = 'u8[98304]{0}', space=vmem, size = 0x18000, scoped, tag = 'scoped memory for tpu_custom_call.1']
            #allocation20 [shape = 'u8[32768]{0}', space=vmem, size = 0x8000, scoped, tag = 'scoped memory for tpu_custom_call.1']
            %s277 = scalar_lea.sflag [#allocation6], 1
            // Predicated region
            $region62: #{tpu_custom_call.1} parent=61 // pred_check
              _
            $region63: #{tpu_custom_call.1} parent=61 // pred_check_branch
              %279 = sbr.rel target = $region65
            $region64: #{tpu_custom_call.1} parent=61 // pred_region
              %280 = sst [smem:[#allocation17]] [#allocation22]
              %281 = sst [smem:[#allocation18]] [#allocation21]
            $region65: #{tpu_custom_call.1} parent=61 // pred_fallthru
              _
            %283 = shalt.err (0)
            %s285 = sshll.u32 [#allocation19], 4
            %s286 = int_to_ptr.vmem [resolvable:$true] %s285
            %288 = dma.hbm_to_vmem [thread:$0]  %s1, 3072, %s286, %s277
            %s289 = scalar_lea.sflag [#allocation6], 2
            // Predicated region
            $region66: #{tpu_custom_call.1} parent=61 // pred_check
              _
            $region67: #{tpu_custom_call.1} parent=61 // pred_check_branch
              %291 = sbr.rel target = $region69
            $region68: #{tpu_custom_call.1} parent=61 // pred_region
              %292 = sst [smem:[#allocation17]] [#allocation24]
              %293 = sst [smem:[#allocation18]] [#allocation23]
            $region69: #{tpu_custom_call.1} parent=61 // pred_fallthru
              _
            %295 = shalt.err (0)
            %s297 = sshll.u32 [#allocation20], 4
            %s298 = int_to_ptr.vmem [resolvable:$true] %s297
            %300 = dma.hbm_to_vmem [thread:$0]  %s2, 1024, %s298, %s289
            %s301 = smul.u32 4, 48
            %s302 = smul.u32 %s301, 1
            %s303 = sshll.u32 %s302, 4
            %304 = dma.done %s277, %s303
            %s305 = smul.u32 4, 16
            %s306 = smul.u32 %s305, 1
            %s307 = sshll.u32 %s306, 4
            %308 = dma.done %s289, %s307
            %v309 = vld [vmem:[#allocation19] sm:$0xff]
            %v310 = vld [vmem:[#allocation19 + $0x8] sm:$0xff]
            %v311 = vld [vmem:[#allocation19 + $0x10] sm:$0xff]
            %v312 = vld [vmem:[#allocation19 + $0x18] sm:$0xff]
            %v313 = vld [vmem:[#allocation19 + $0x20] sm:$0xff]
            %v314 = vld [vmem:[#allocation19 + $0x28] sm:$0xff]
            %v315 = vld [vmem:[#allocation19 + $0x30] sm:$0xff]
            %v316 = vld [vmem:[#allocation19 + $0x38] sm:$0xff]
            %v317 = vld [vmem:[#allocation19 + $0x40] sm:$0xff]
            %v318 = vld [vmem:[#allocation19 + $0x48] sm:$0xff]
            %v319 = vld [vmem:[#allocation19 + $0x50] sm:$0xff]
            %v320 = vld [vmem:[#allocation19 + $0x58] sm:$0xff]
            %v321 = vld [vmem:[#allocation19 + $0x60] sm:$0xff]
            %v322 = vld [vmem:[#allocation19 + $0x68] sm:$0xff]
            %v323 = vld [vmem:[#allocation19 + $0x70] sm:$0xff]
            %v324 = vld [vmem:[#allocation19 + $0x78] sm:$0xff]
            %v325 = vld [vmem:[#allocation19 + $0x80] sm:$0xff]
            %v326 = vld [vmem:[#allocation19 + $0x88] sm:$0xff]
            %v327 = vld [vmem:[#allocation19 + $0x90] sm:$0xff]
            %v328 = vld [vmem:[#allocation19 + $0x98] sm:$0xff]
            %v329 = vld [vmem:[#allocation19 + $0xa0] sm:$0xff]
            %v330 = vld [vmem:[#allocation19 + $0xa8] sm:$0xff]
            %v331 = vld [vmem:[#allocation19 + $0xb0] sm:$0xff]
            %v332 = vld [vmem:[#allocation19 + $0xb8] sm:$0xff]
            %v333 = vld [vmem:[#allocation20] sm:$0xff]
            %v334 = vld [vmem:[#allocation20 + $0x8] sm:$0xff]
            %v335 = vld [vmem:[#allocation20 + $0x10] sm:$0xff]
            %v336 = vld [vmem:[#allocation20 + $0x18] sm:$0xff]
            %v337 = vld [vmem:[#allocation20 + $0x20] sm:$0xff]
            %v338 = vld [vmem:[#allocation20 + $0x28] sm:$0xff]
            %v339 = vld [vmem:[#allocation20 + $0x30] sm:$0xff]
            %v340 = vld [vmem:[#allocation20 + $0x38] sm:$0xff]
            %v341 = vld [vmem:[%s3] sm:$0x1]
            %v343 = vlaneseq
            %v344 = vshrl.u32 %v343, 7
            %v345 = vsub.s32 0, %v344
            %v346 = vrot.slane %v341, %v345
            %348 = vmatprep.subr.bf16.mxu0 0
            %349 = vmatpush1.bf16.msra.mxu0 %v340
            %350 = vmatprep.subr.bf16.mxu0 0
            %351 = vmatpush1.bf16.msra.mxu0 %v339
            %352 = vmatprep.subr.bf16.mxu0 0
            %353 = vmatpush1.bf16.msra.mxu0 %v338
            %354 = vmatprep.subr.bf16.mxu0 0
            %355 = vmatpush1.bf16.msra.mxu0 %v337
            %356 = vmatprep.subr.bf16.mxu0 0
            %357 = vmatpush1.bf16.msra.mxu0 %v336
            %358 = vmatprep.subr.bf16.mxu0 0
            %359 = vmatpush1.bf16.msra.mxu0 %v335
            %360 = vmatprep.subr.bf16.mxu0 0
            %361 = vmatpush1.bf16.msra.mxu0 %v334
            %362 = vmatprep.subr.bf16.mxu0 0
            %363 = vmatpush1.bf16.msra.mxu0 %v333
            %364 = vmatprep.subr.bf16.mxu0 0
            %365 = vmatpush2.bf16.msra.mxu0 0
            %366 = vmatprep.subr.bf16.mxu0 0
            %367 = vmatpush2.bf16.msra.mxu0 0
            %368 = vmatprep.subr.bf16.mxu0 0
            %369 = vmatpush2.bf16.msra.mxu0 0
            %370 = vmatprep.subr.bf16.mxu0 0
            %371 = vmatpush2.bf16.msra.mxu0 0
            %372 = vmatprep.subr.bf16.mxu0 0
            %373 = vmatpush2.bf16.msra.mxu0 0
            %374 = vmatprep.subr.bf16.mxu0 0
            %375 = vmatpush2.bf16.msra.mxu0 0
            %376 = vmatprep.subr.bf16.mxu0 0
            %377 = vmatpush2.bf16.msra.mxu0 0
            %378 = vmatprep.subr.bf16.mxu0 0
            %379 = vmatpush2.bf16.msra.mxu0 0
            %380 = vmatprep.mubr.bf16.mxu0 0
            %381 = vmatmul.mubr.bf16.gmra.mxu0 %v309
            %v382 = vpop.f32.mrf.mxu0
            %v383 = vadd.f32 %v346, %v382
            %v384 = vpop.f32.mrf.mxu0
            %v385 = vpop.f32.mrf.mxu0
            %v386 = vadd.f32 %v346, %v385
            %v387 = vpop.f32.mrf.mxu0
            %388 = vmatprep.mubr.bf16.mxu0 0
            %389 = vmatmul.mubr.bf16.gmra.mxu0 %v310
            %v390 = vpop.f32.mrf.mxu0
            %v391 = vadd.f32 %v346, %v390
            %v392 = vpop.f32.mrf.mxu0
            %v393 = vpop.f32.mrf.mxu0
            %v394 = vadd.f32 %v346, %v393
            %v395 = vpop.f32.mrf.mxu0
            %396 = vmatprep.mubr.bf16.mxu0 0
            %397 = vmatmul.mubr.bf16.gmra.mxu0 %v311
            %v398 = vpop.f32.mrf.mxu0
            %v399 = vadd.f32 %v346, %v398
            %v400 = vpop.f32.mrf.mxu0
            %v401 = vpop.f32.mrf.mxu0
            %v402 = vadd.f32 %v346, %v401
            %v403 = vpop.f32.mrf.mxu0
            %404 = vmatprep.mubr.bf16.mxu0 0
            %405 = vmatmul.mubr.bf16.gmra.mxu0 %v312
            %v406 = vpop.f32.mrf.mxu0
            %v407 = vadd.f32 %v346, %v406
            %v408 = vpop.f32.mrf.mxu0
            %v409 = vpop.f32.mrf.mxu0
            %v410 = vadd.f32 %v346, %v409
            %v411 = vpop.f32.mrf.mxu0
            %412 = vmatprep.mubr.bf16.mxu0 0
            %413 = vmatmul.mubr.bf16.gmra.mxu0 %v313
            %v414 = vpop.f32.mrf.mxu0
            %v415 = vadd.f32 %v346, %v414
            %v416 = vpop.f32.mrf.mxu0
            %v417 = vpop.f32.mrf.mxu0
            %v418 = vadd.f32 %v346, %v417
            %v419 = vpop.f32.mrf.mxu0
            %420 = vmatprep.mubr.bf16.mxu0 0
            %421 = vmatmul.mubr.bf16.gmra.mxu0 %v314
            %v422 = vpop.f32.mrf.mxu0
            %v423 = vadd.f32 %v346, %v422
            %v424 = vpop.f32.mrf.mxu0
            %v425 = vpop.f32.mrf.mxu0
            %v426 = vadd.f32 %v346, %v425
            %v427 = vpop.f32.mrf.mxu0
            %428 = vmatprep.mubr.bf16.mxu0 0
            %429 = vmatmul.mubr.bf16.gmra.mxu0 %v315
            %v430 = vpop.f32.mrf.mxu0
            %v431 = vadd.f32 %v346, %v430
            %v432 = vpop.f32.mrf.mxu0
            %v433 = vpop.f32.mrf.mxu0
            %v434 = vadd.f32 %v346, %v433
            %v435 = vpop.f32.mrf.mxu0
            %436 = vmatprep.mubr.bf16.mxu0 0
            %437 = vmatmul.mubr.bf16.gmra.mxu0 %v316
            %v438 = vpop.f32.mrf.mxu0
            %v439 = vadd.f32 %v346, %v438
            %v440 = vpop.f32.mrf.mxu0
            %v441 = vpop.f32.mrf.mxu0
            %v442 = vadd.f32 %v346, %v441
            %v443 = vpop.f32.mrf.mxu0
            %444 = vmatprep.mubr.bf16.mxu0 0
            %445 = vmatmul.mubr.bf16.gmra.mxu0 %v317
            %v446 = vpop.f32.mrf.mxu0
            %v447 = vadd.f32 %v346, %v446
            %v448 = vpop.f32.mrf.mxu0
            %v449 = vpop.f32.mrf.mxu0
            %v450 = vadd.f32 %v346, %v449
            %v451 = vpop.f32.mrf.mxu0
            %452 = vmatprep.mubr.bf16.mxu0 0
            %453 = vmatmul.mubr.bf16.gmra.mxu0 %v318
            %v454 = vpop.f32.mrf.mxu0
            %v455 = vadd.f32 %v346, %v454
            %v456 = vpop.f32.mrf.mxu0
            %v457 = vpop.f32.mrf.mxu0
            %v458 = vadd.f32 %v346, %v457
            %v459 = vpop.f32.mrf.mxu0
            %460 = vmatprep.mubr.bf16.mxu0 0
            %461 = vmatmul.mubr.bf16.gmra.mxu0 %v319
            %v462 = vpop.f32.mrf.mxu0
            %v463 = vadd.f32 %v346, %v462
            %v464 = vpop.f32.mrf.mxu0
            %v465 = vpop.f32.mrf.mxu0
            %v466 = vadd.f32 %v346, %v465
            %v467 = vpop.f32.mrf.mxu0
            %468 = vmatprep.mubr.bf16.mxu0 0
            %469 = vmatmul.mubr.bf16.gmra.mxu0 %v320
            %v470 = vpop.f32.mrf.mxu0
            %v471 = vadd.f32 %v346, %v470
            %v472 = vpop.f32.mrf.mxu0
            %v473 = vpop.f32.mrf.mxu0
            %v474 = vadd.f32 %v346, %v473
            %v475 = vpop.f32.mrf.mxu0
            %476 = vmatprep.mubr.bf16.mxu0 0
            %477 = vmatmul.mubr.bf16.gmra.mxu0 %v321
            %v478 = vpop.f32.mrf.mxu0
            %v479 = vadd.f32 %v346, %v478
            %v480 = vpop.f32.mrf.mxu0
            %v481 = vpop.f32.mrf.mxu0
            %v482 = vadd.f32 %v346, %v481
            %v483 = vpop.f32.mrf.mxu0
            %484 = vmatprep.mubr.bf16.mxu0 0
            %485 = vmatmul.mubr.bf16.gmra.mxu0 %v322
            %v486 = vpop.f32.mrf.mxu0
            %v487 = vadd.f32 %v346, %v486
            %v488 = vpop.f32.mrf.mxu0
            %v489 = vpop.f32.mrf.mxu0
            %v490 = vadd.f32 %v346, %v489
            %v491 = vpop.f32.mrf.mxu0
            %492 = vmatprep.mubr.bf16.mxu0 0
            %493 = vmatmul.mubr.bf16.gmra.mxu0 %v323
            %v494 = vpop.f32.mrf.mxu0
            %v495 = vadd.f32 %v346, %v494
            %v496 = vpop.f32.mrf.mxu0
            %v497 = vpop.f32.mrf.mxu0
            %v498 = vadd.f32 %v346, %v497
            %v499 = vpop.f32.mrf.mxu0
            %500 = vmatprep.mubr.bf16.mxu0 0
            %501 = vmatmul.mubr.bf16.gmra.mxu0 %v324
            %v502 = vpop.f32.mrf.mxu0
            %v503 = vadd.f32 %v346, %v502
            %v504 = vpop.f32.mrf.mxu0
            %v505 = vpop.f32.mrf.mxu0
            %v506 = vadd.f32 %v346, %v505
            %v507 = vpop.f32.mrf.mxu0
            %508 = vmatprep.mubr.bf16.mxu0 0
            %509 = vmatmul.mubr.bf16.gmra.mxu0 %v325
            %v510 = vpop.f32.mrf.mxu0
            %v511 = vadd.f32 %v346, %v510
            %v512 = vpop.f32.mrf.mxu0
            %v513 = vpop.f32.mrf.mxu0
            %v514 = vadd.f32 %v346, %v513
            %v515 = vpop.f32.mrf.mxu0
            %516 = vmatprep.mubr.bf16.mxu0 0
            %517 = vmatmul.mubr.bf16.gmra.mxu0 %v326
            %v518 = vpop.f32.mrf.mxu0
            %v519 = vadd.f32 %v346, %v518
            %v520 = vpop.f32.mrf.mxu0
            %v521 = vpop.f32.mrf.mxu0
            %v522 = vadd.f32 %v346, %v521
            %v523 = vpop.f32.mrf.mxu0
            %524 = vmatprep.mubr.bf16.mxu0 0
            %525 = vmatmul.mubr.bf16.gmra.mxu0 %v327
            %v526 = vpop.f32.mrf.mxu0
            %v527 = vadd.f32 %v346, %v526
            %v528 = vpop.f32.mrf.mxu0
            %v529 = vpop.f32.mrf.mxu0
            %v530 = vadd.f32 %v346, %v529
            %v531 = vpop.f32.mrf.mxu0
            %532 = vmatprep.mubr.bf16.mxu0 0
            %533 = vmatmul.mubr.bf16.gmra.mxu0 %v328
            %v534 = vpop.f32.mrf.mxu0
            %v535 = vadd.f32 %v346, %v534
            %v536 = vpop.f32.mrf.mxu0
            %v537 = vpop.f32.mrf.mxu0
            %v538 = vadd.f32 %v346, %v537
            %v539 = vpop.f32.mrf.mxu0
            %540 = vmatprep.mubr.bf16.mxu0 0
            %541 = vmatmul.mubr.bf16.gmra.mxu0 %v329
            %v542 = vpop.f32.mrf.mxu0
            %v543 = vadd.f32 %v346, %v542
            %v544 = vpop.f32.mrf.mxu0
            %v545 = vpop.f32.mrf.mxu0
            %v546 = vadd.f32 %v346, %v545
            %v547 = vpop.f32.mrf.mxu0
            %548 = vmatprep.mubr.bf16.mxu0 0
            %549 = vmatmul.mubr.bf16.gmra.mxu0 %v330
            %v550 = vpop.f32.mrf.mxu0
            %v551 = vadd.f32 %v346, %v550
            %v552 = vpop.f32.mrf.mxu0
            %v553 = vpop.f32.mrf.mxu0
            %v554 = vadd.f32 %v346, %v553
            %v555 = vpop.f32.mrf.mxu0
            %556 = vmatprep.mubr.bf16.mxu0 0
            %557 = vmatmul.mubr.bf16.gmra.mxu0 %v331
            %v558 = vpop.f32.mrf.mxu0
            %v559 = vadd.f32 %v346, %v558
            %v560 = vpop.f32.mrf.mxu0
            %v561 = vpop.f32.mrf.mxu0
            %v562 = vadd.f32 %v346, %v561
            %v563 = vpop.f32.mrf.mxu0
            %564 = vmatprep.mubr.bf16.mxu0 0
            %565 = vmatmul.mubr.bf16.gmra.mxu0 %v332
            %v566 = vpop.f32.mrf.mxu0
            %v567 = vadd.f32 %v346, %v566
            %v568 = vpop.f32.mrf.mxu0
            %v569 = vpop.f32.mrf.mxu0
            %v570 = vadd.f32 %v346, %v569
            %v571 = vpop.f32.mrf.mxu0
            %572 = vdwg.mxu0
            %v573 = vmax.f32 %v383, 0.0
            %v574 = vmax.f32 %v386, 0.0
            %v575 = vmax.f32 %v391, 0.0
            %v576 = vmax.f32 %v394, 0.0
            %v577 = vmax.f32 %v399, 0.0
            %v578 = vmax.f32 %v402, 0.0
            %v579 = vmax.f32 %v407, 0.0
            %v580 = vmax.f32 %v410, 0.0
            %v581 = vmax.f32 %v415, 0.0
            %v582 = vmax.f32 %v418, 0.0
            %v583 = vmax.f32 %v423, 0.0
            %v584 = vmax.f32 %v426, 0.0
            %v585 = vmax.f32 %v431, 0.0
            %v586 = vmax.f32 %v434, 0.0
            %v587 = vmax.f32 %v439, 0.0
            %v588 = vmax.f32 %v442, 0.0
            %v589 = vmax.f32 %v447, 0.0
            %v590 = vmax.f32 %v450, 0.0
            %v591 = vmax.f32 %v455, 0.0
            %v592 = vmax.f32 %v458, 0.0
            %v593 = vmax.f32 %v463, 0.0
            %v594 = vmax.f32 %v466, 0.0
            %v595 = vmax.f32 %v471, 0.0
            %v596 = vmax.f32 %v474, 0.0
            %v597 = vmax.f32 %v479, 0.0
            %v598 = vmax.f32 %v482, 0.0
            %v599 = vmax.f32 %v487, 0.0
            %v600 = vmax.f32 %v490, 0.0
            %v601 = vmax.f32 %v495, 0.0
            %v602 = vmax.f32 %v498, 0.0
            %v603 = vmax.f32 %v503, 0.0
            %v604 = vmax.f32 %v506, 0.0
            %v605 = vmax.f32 %v511, 0.0
            %v606 = vmax.f32 %v514, 0.0
            %v607 = vmax.f32 %v519, 0.0
            %v608 = vmax.f32 %v522, 0.0
            %v609 = vmax.f32 %v527, 0.0
            %v610 = vmax.f32 %v530, 0.0
            %v611 = vmax.f32 %v535, 0.0
            %v612 = vmax.f32 %v538, 0.0
            %v613 = vmax.f32 %v543, 0.0
            %v614 = vmax.f32 %v546, 0.0
            %v615 = vmax.f32 %v551, 0.0
            %v616 = vmax.f32 %v554, 0.0
            %v617 = vmax.f32 %v559, 0.0
            %v618 = vmax.f32 %v562, 0.0
            %v619 = vmax.f32 %v567, 0.0
            %v620 = vmax.f32 %v570, 0.0
            %621 = vst [vmem:[#allocation3] sm:$0xff] %v573
            %622 = vst [vmem:[#allocation3 + $0x8] sm:$0xff] %v574
            %623 = vst [vmem:[#allocation3 + $0x10] sm:$0xff] %v575
            %624 = vst [vmem:[#allocation3 + $0x18] sm:$0xff] %v576
            %625 = vst [vmem:[#allocation3 + $0x20] sm:$0xff] %v577
            %626 = vst [vmem:[#allocation3 + $0x28] sm:$0xff] %v578
            %627 = vst [vmem:[#allocation3 + $0x30] sm:$0xff] %v579
            %628 = vst [vmem:[#allocation3 + $0x38] sm:$0xff] %v580
            %629 = vst [vmem:[#allocation3 + $0x40] sm:$0xff] %v581
            %630 = vst [vmem:[#allocation3 + $0x48] sm:$0xff] %v582
            %631 = vst [vmem:[#allocation3 + $0x50] sm:$0xff] %v583
            %632 = vst [vmem:[#allocation3 + $0x58] sm:$0xff] %v584
            %633 = vst [vmem:[#allocation3 + $0x60] sm:$0xff] %v585
            %634 = vst [vmem:[#allocation3 + $0x68] sm:$0xff] %v586
            %635 = vst [vmem:[#allocation3 + $0x70] sm:$0xff] %v587
            %636 = vst [vmem:[#allocation3 + $0x78] sm:$0xff] %v588
            %637 = vst [vmem:[#allocation3 + $0x80] sm:$0xff] %v589
            %638 = vst [vmem:[#allocation3 + $0x88] sm:$0xff] %v590
            %639 = vst [vmem:[#allocation3 + $0x90] sm:$0xff] %v591
            %640 = vst [vmem:[#allocation3 + $0x98] sm:$0xff] %v592
            %641 = vst [vmem:[#allocation3 + $0xa0] sm:$0xff] %v593
            %642 = vst [vmem:[#allocation3 + $0xa8] sm:$0xff] %v594
            %643 = vst [vmem:[#allocation3 + $0xb0] sm:$0xff] %v595
            %644 = vst [vmem:[#allocation3 + $0xb8] sm:$0xff] %v596
            %645 = vst [vmem:[#allocation3 + $0xc0] sm:$0xff] %v597
            %646 = vst [vmem:[#allocation3 + $0xc8] sm:$0xff] %v598
            %647 = vst [vmem:[#allocation3 + $0xd0] sm:$0xff] %v599
            %648 = vst [vmem:[#allocation3 + $0xd8] sm:$0xff] %v600
            %649 = vst [vmem:[#allocation3 + $0xe0] sm:$0xff] %v601
            %650 = vst [vmem:[#allocation3 + $0xe8] sm:$0xff] %v602
            %651 = vst [vmem:[#allocation3 + $0xf0] sm:$0xff] %v603
            %652 = vst [vmem:[#allocation3 + $0xf8] sm:$0xff] %v604
            %653 = vst [vmem:[#allocation3 + $0x100] sm:$0xff] %v605
            %654 = vst [vmem:[#allocation3 + $0x108] sm:$0xff] %v606
            %655 = vst [vmem:[#allocation3 + $0x110] sm:$0xff] %v607
            %656 = vst [vmem:[#allocation3 + $0x118] sm:$0xff] %v608
            %657 = vst [vmem:[#allocation3 + $0x120] sm:$0xff] %v609
            %658 = vst [vmem:[#allocation3 + $0x128] sm:$0xff] %v610
            %659 = vst [vmem:[#allocation3 + $0x130] sm:$0xff] %v611
            %660 = vst [vmem:[#allocation3 + $0x138] sm:$0xff] %v612
            %661 = vst [vmem:[#allocation3 + $0x140] sm:$0xff] %v613
            %662 = vst [vmem:[#allocation3 + $0x148] sm:$0xff] %v614
            %663 = vst [vmem:[#allocation3 + $0x150] sm:$0xff] %v615
            %664 = vst [vmem:[#allocation3 + $0x158] sm:$0xff] %v616
            %665 = vst [vmem:[#allocation3 + $0x160] sm:$0xff] %v617
            %666 = vst [vmem:[#allocation3 + $0x168] sm:$0xff] %v618
            %667 = vst [vmem:[#allocation3 + $0x170] sm:$0xff] %v619
            %668 = vst [vmem:[#allocation3 + $0x178] sm:$0xff] %v620
            %669 = vst [vmem:[#allocation4] sm:$0xff] %v573
            %670 = vst [vmem:[#allocation4 + $0x8] sm:$0xff] %v574
            %671 = vst [vmem:[#allocation4 + $0x10] sm:$0xff] %v575
            %672 = vst [vmem:[#allocation4 + $0x18] sm:$0xff] %v576
            %673 = vst [vmem:[#allocation4 + $0x20] sm:$0xff] %v577
            %674 = vst [vmem:[#allocation4 + $0x28] sm:$0xff] %v578
            %675 = vst [vmem:[#allocation4 + $0x30] sm:$0xff] %v579
            %676 = vst [vmem:[#allocation4 + $0x38] sm:$0xff] %v580
            %677 = vst [vmem:[#allocation4 + $0x40] sm:$0xff] %v581
            %678 = vst [vmem:[#allocation4 + $0x48] sm:$0xff] %v582
            %679 = vst [vmem:[#allocation4 + $0x50] sm:$0xff] %v583
            %680 = vst [vmem:[#allocation4 + $0x58] sm:$0xff] %v584
            %681 = vst [vmem:[#allocation4 + $0x60] sm:$0xff] %v585
            %682 = vst [vmem:[#allocation4 + $0x68] sm:$0xff] %v586
            %683 = vst [vmem:[#allocation4 + $0x70] sm:$0xff] %v587
            %684 = vst [vmem:[#allocation4 + $0x78] sm:$0xff] %v588
            %685 = vst [vmem:[#allocation4 + $0x80] sm:$0xff] %v589
            %686 = vst [vmem:[#allocation4 + $0x88] sm:$0xff] %v590
            %687 = vst [vmem:[#allocation4 + $0x90] sm:$0xff] %v591
            %688 = vst [vmem:[#allocation4 + $0x98] sm:$0xff] %v592
            %689 = vst [vmem:[#allocation4 + $0xa0] sm:$0xff] %v593
            %690 = vst [vmem:[#allocation4 + $0xa8] sm:$0xff] %v594
            %691 = vst [vmem:[#allocation4 + $0xb0] sm:$0xff] %v595
            %692 = vst [vmem:[#allocation4 + $0xb8] sm:$0xff] %v596
            %693 = vst [vmem:[#allocation4 + $0xc0] sm:$0xff] %v597
            %694 = vst [vmem:[#allocation4 + $0xc8] sm:$0xff] %v598
            %695 = vst [vmem:[#allocation4 + $0xd0] sm:$0xff] %v599
            %696 = vst [vmem:[#allocation4 + $0xd8] sm:$0xff] %v600
            %697 = vst [vmem:[#allocation4 + $0xe0] sm:$0xff] %v601
            %698 = vst [vmem:[#allocation4 + $0xe8] sm:$0xff] %v602
            %699 = vst [vmem:[#allocation4 + $0xf0] sm:$0xff] %v603
            %700 = vst [vmem:[#allocation4 + $0xf8] sm:$0xff] %v604
            %701 = vst [vmem:[#allocation4 + $0x100] sm:$0xff] %v605
            %702 = vst [vmem:[#allocation4 + $0x108] sm:$0xff] %v606
            %703 = vst [vmem:[#allocation4 + $0x110] sm:$0xff] %v607
            %704 = vst [vmem:[#allocation4 + $0x118] sm:$0xff] %v608
            %705 = vst [vmem:[#allocation4 + $0x120] sm:$0xff] %v609
            %706 = vst [vmem:[#allocation4 + $0x128] sm:$0xff] %v610
            %707 = vst [vmem:[#allocation4 + $0x130] sm:$0xff] %v611
            %708 = vst [vmem:[#allocation4 + $0x138] sm:$0xff] %v612
            %709 = vst [vmem:[#allocation4 + $0x140] sm:$0xff] %v613
            %710 = vst [vmem:[#allocation4 + $0x148] sm:$0xff] %v614
            %711 = vst [vmem:[#allocation4 + $0x150] sm:$0xff] %v615
            %712 = vst [vmem:[#allocation4 + $0x158] sm:$0xff] %v616
            %713 = vst [vmem:[#allocation4 + $0x160] sm:$0xff] %v617
            %714 = vst [vmem:[#allocation4 + $0x168] sm:$0xff] %v618
            %715 = vst [vmem:[#allocation4 + $0x170] sm:$0xff] %v619
            %716 = vst [vmem:[#allocation4 + $0x178] sm:$0xff] %v620
          %s717 = smul.u32 4, 48
          %s718 = smul.u32 %s717, 3
          %s719 = sshll.u32 %s718, 4
          %720 = dma.done [#allocation6], %s719
        $region56: #{tpu_custom_call.1} parent=39 // pred_fallthru
          _
        %s721 = sld [smem:[#allocation7 + %s25]]
        %s722 = ssub.f32 1.0, %s721
        %v723 = vld [vmem:[#allocation3] sm:$0xff]
        %v724 = vld [vmem:[#allocation3 + $0x8] sm:$0xff]
        %v725 = vld [vmem:[#allocation3 + $0x10] sm:$0xff]
        %v726 = vld [vmem:[#allocation3 + $0x18] sm:$0xff]
        %v727 = vld [vmem:[#allocation3 + $0x20] sm:$0xff]
        %v728 = vld [vmem:[#allocation3 + $0x28] sm:$0xff]
        %v729 = vld [vmem:[#allocation3 + $0x30] sm:$0xff]
        %v730 = vld [vmem:[#allocation3 + $0x38] sm:$0xff]
        %v731 = vld [vmem:[#allocation3 + $0x40] sm:$0xff]
        %v732 = vld [vmem:[#allocation3 + $0x48] sm:$0xff]
        %v733 = vld [vmem:[#allocation3 + $0x50] sm:$0xff]
        %v734 = vld [vmem:[#allocation3 + $0x58] sm:$0xff]
        %v735 = vld [vmem:[#allocation3 + $0x60] sm:$0xff]
        %v736 = vld [vmem:[#allocation3 + $0x68] sm:$0xff]
        %v737 = vld [vmem:[#allocation3 + $0x70] sm:$0xff]
        %v738 = vld [vmem:[#allocation3 + $0x78] sm:$0xff]
        %v739 = vld [vmem:[#allocation3 + $0x80] sm:$0xff]
        %v740 = vld [vmem:[#allocation3 + $0x88] sm:$0xff]
        %v741 = vld [vmem:[#allocation3 + $0x90] sm:$0xff]
        %v742 = vld [vmem:[#allocation3 + $0x98] sm:$0xff]
        %v743 = vld [vmem:[#allocation3 + $0xa0] sm:$0xff]
        %v744 = vld [vmem:[#allocation3 + $0xa8] sm:$0xff]
        %v745 = vld [vmem:[#allocation3 + $0xb0] sm:$0xff]
        %v746 = vld [vmem:[#allocation3 + $0xb8] sm:$0xff]
        %v747 = vld [vmem:[#allocation3 + $0xc0] sm:$0xff]
        %v748 = vld [vmem:[#allocation3 + $0xc8] sm:$0xff]
        %v749 = vld [vmem:[#allocation3 + $0xd0] sm:$0xff]
        %v750 = vld [vmem:[#allocation3 + $0xd8] sm:$0xff]
        %v751 = vld [vmem:[#allocation3 + $0xe0] sm:$0xff]
        %v752 = vld [vmem:[#allocation3 + $0xe8] sm:$0xff]
        %v753 = vld [vmem:[#allocation3 + $0xf0] sm:$0xff]
        %v754 = vld [vmem:[#allocation3 + $0xf8] sm:$0xff]
        %v755 = vld [vmem:[#allocation3 + $0x100] sm:$0xff]
        %v756 = vld [vmem:[#allocation3 + $0x108] sm:$0xff]
        %v757 = vld [vmem:[#allocation3 + $0x110] sm:$0xff]
        %v758 = vld [vmem:[#allocation3 + $0x118] sm:$0xff]
        %v759 = vld [vmem:[#allocation3 + $0x120] sm:$0xff]
        %v760 = vld [vmem:[#allocation3 + $0x128] sm:$0xff]
        %v761 = vld [vmem:[#allocation3 + $0x130] sm:$0xff]
        %v762 = vld [vmem:[#allocation3 + $0x138] sm:$0xff]
        %v763 = vld [vmem:[#allocation3 + $0x140] sm:$0xff]
        %v764 = vld [vmem:[#allocation3 + $0x148] sm:$0xff]
        %v765 = vld [vmem:[#allocation3 + $0x150] sm:$0xff]
        %v766 = vld [vmem:[#allocation3 + $0x158] sm:$0xff]
        %v767 = vld [vmem:[#allocation3 + $0x160] sm:$0xff]
        %v768 = vld [vmem:[#allocation3 + $0x168] sm:$0xff]
        %v769 = vld [vmem:[#allocation3 + $0x170] sm:$0xff]
        %v770 = vld [vmem:[#allocation3 + $0x178] sm:$0xff]
        %v771 = vpack.c.bf16 %v724, %v723
        %v772 = vpack.c.bf16 %v726, %v725
        %v773 = vpack.c.bf16 %v728, %v727
        %v774 = vpack.c.bf16 %v730, %v729
        %v775 = vpack.c.bf16 %v732, %v731
        %v776 = vpack.c.bf16 %v734, %v733
        %v777 = vpack.c.bf16 %v736, %v735
        %v778 = vpack.c.bf16 %v738, %v737
        %v779 = vpack.c.bf16 %v740, %v739
        %v780 = vpack.c.bf16 %v742, %v741
        %v781 = vpack.c.bf16 %v744, %v743
        %v782 = vpack.c.bf16 %v746, %v745
        %v783 = vpack.c.bf16 %v748, %v747
        %v784 = vpack.c.bf16 %v750, %v749
        %v785 = vpack.c.bf16 %v752, %v751
        %v786 = vpack.c.bf16 %v754, %v753
        %v787 = vpack.c.bf16 %v756, %v755
        %v788 = vpack.c.bf16 %v758, %v757
        %v789 = vpack.c.bf16 %v760, %v759
        %v790 = vpack.c.bf16 %v762, %v761
        %v791 = vpack.c.bf16 %v764, %v763
        %v792 = vpack.c.bf16 %v766, %v765
        %v793 = vpack.c.bf16 %v768, %v767
        %v794 = vpack.c.bf16 %v770, %v769
        loop: start=0, step=1, limit=3
        $region70: #{tpu_custom_call.1} parent=39 // loop_pre_header
          _
        $region71: #{tpu_custom_call.1} parent=39 // loop_header
          %s796 = sphi 0, %s800
          %p797 = scmp.ge.s32.totalorder %s796, 3
        $region72: #{tpu_custom_call.1} parent=39 // loop_header_branch
          %799 = sbr.rel (%p797) target = $region76
        $region73: #{tpu_custom_call.1} parent=39 // loop_body
          %s801 = smul.u32 %s796, 128
          %s802 = sshra.s32 %s801, 3
          %s803 = sand.u32 %s801, 7
          %s804 = smul.u32 %s802, 3
          %s805 = smul.addr %s804, 4
          %s806 = scalar_lea.vmem [#allocation2], %s805
          %v807 = vld [vmem:[%s806] sm:$0xff]
          %v808 = vld [vmem:[%s806 + $0x8] sm:$0xf]
          %v809 = vld [vmem:[%s806 + $0xc] sm:$0xff]
          %v810 = vld [vmem:[%s806 + $0x14] sm:$0xf]
          %v811 = vld [vmem:[%s806 + $0x18] sm:$0xff]
          %v812 = vld [vmem:[%s806 + $0x20] sm:$0xf]
          %v813 = vld [vmem:[%s806 + $0x24] sm:$0xff]
          %v814 = vld [vmem:[%s806 + $0x2c] sm:$0xf]
          %v815 = vld [vmem:[%s806 + $0x30] sm:$0xff]
          %v816 = vld [vmem:[%s806 + $0x38] sm:$0xf]
          %v817 = vld [vmem:[%s806 + $0x3c] sm:$0xff]
          %v818 = vld [vmem:[%s806 + $0x44] sm:$0xf]
          %v819 = vld [vmem:[%s806 + $0x48] sm:$0xff]
          %v820 = vld [vmem:[%s806 + $0x50] sm:$0xf]
          %v821 = vld [vmem:[%s806 + $0x54] sm:$0xff]
          %v822 = vld [vmem:[%s806 + $0x5c] sm:$0xf]
          %v823 = vld [vmem:[%s806 + $0x60] sm:$0xff]
          %v824 = vld [vmem:[%s806 + $0x68] sm:$0xf]
          %v825 = vld [vmem:[%s806 + $0x6c] sm:$0xff]
          %v826 = vld [vmem:[%s806 + $0x74] sm:$0xf]
          %v827 = vld [vmem:[%s806 + $0x78] sm:$0xff]
          %v828 = vld [vmem:[%s806 + $0x80] sm:$0xf]
          %v829 = vld [vmem:[%s806 + $0x84] sm:$0xff]
          %v830 = vld [vmem:[%s806 + $0x8c] sm:$0xf]
          %v831 = vld [vmem:[%s806 + $0x90] sm:$0xff]
          %v832 = vld [vmem:[%s806 + $0x98] sm:$0xf]
          %v833 = vld [vmem:[%s806 + $0x9c] sm:$0xff]
          %v834 = vld [vmem:[%s806 + $0xa4] sm:$0xf]
          %v835 = vld [vmem:[%s806 + $0xa8] sm:$0xff]
          %v836 = vld [vmem:[%s806 + $0xb0] sm:$0xf]
          %v837 = vld [vmem:[%s806 + $0xb4] sm:$0xff]
          %v838 = vld [vmem:[%s806 + $0xbc] sm:$0xf]
          %v871 = vunpack.c.l.b16 %v807
          %v872 = vunpack.c.h.b16 %v807
          %v873 = vunpack.c.l.b16 %v808
          %v874 = vunpack.c.l.b16 %v809
          %v875 = vunpack.c.h.b16 %v809
          %v876 = vunpack.c.l.b16 %v810
          %v877 = vunpack.c.l.b16 %v811
          %v878 = vunpack.c.h.b16 %v811
          %v879 = vunpack.c.l.b16 %v812
          %v880 = vunpack.c.l.b16 %v813
          %v881 = vunpack.c.h.b16 %v813
          %v882 = vunpack.c.l.b16 %v814
          %v883 = vunpack.c.l.b16 %v815
          %v884 = vunpack.c.h.b16 %v815
          %v885 = vunpack.c.l.b16 %v816
          %v886 = vunpack.c.l.b16 %v817
          %v887 = vunpack.c.h.b16 %v817
          %v888 = vunpack.c.l.b16 %v818
          %v889 = vunpack.c.l.b16 %v819
          %v890 = vunpack.c.h.b16 %v819
          %v891 = vunpack.c.l.b16 %v820
          %v892 = vunpack.c.l.b16 %v821
          %v893 = vunpack.c.h.b16 %v821
          %v894 = vunpack.c.l.b16 %v822
          %v895 = vunpack.c.l.b16 %v823
          %v896 = vunpack.c.h.b16 %v823
          %v897 = vunpack.c.l.b16 %v824
          %v898 = vunpack.c.l.b16 %v825
          %v899 = vunpack.c.h.b16 %v825
          %v900 = vunpack.c.l.b16 %v826
          %v901 = vunpack.c.l.b16 %v827
          %v902 = vunpack.c.h.b16 %v827
          %v903 = vunpack.c.l.b16 %v828
          %v904 = vunpack.c.l.b16 %v829
          %v905 = vunpack.c.h.b16 %v829
          %v906 = vunpack.c.l.b16 %v830
          %v907 = vunpack.c.l.b16 %v831
          %v908 = vunpack.c.h.b16 %v831
          %v909 = vunpack.c.l.b16 %v832
          %v910 = vunpack.c.l.b16 %v833
          %v911 = vunpack.c.h.b16 %v833
          %v912 = vunpack.c.l.b16 %v834
          %v913 = vunpack.c.l.b16 %v835
          %v914 = vunpack.c.h.b16 %v835
          %v915 = vunpack.c.l.b16 %v836
          %v916 = vunpack.c.l.b16 %v837
          %v917 = vunpack.c.h.b16 %v837
          %v918 = vunpack.c.l.b16 %v838
          %v919 = vpack.c.b16 %v874, %v871
          %v920 = vpack.c.b16 %v875, %v872
          %v921 = vpack.c.b16 %v876, %v873
          %v922 = vpack.c.b16 %v880, %v877
          %v923 = vpack.c.b16 %v881, %v878
          %v924 = vpack.c.b16 %v882, %v879
          %v925 = vpack.c.b16 %v886, %v883
          %v926 = vpack.c.b16 %v887, %v884
          %v927 = vpack.c.b16 %v888, %v885
          %v928 = vpack.c.b16 %v892, %v889
          %v929 = vpack.c.b16 %v893, %v890
          %v930 = vpack.c.b16 %v894, %v891
          %v931 = vpack.c.b16 %v898, %v895
          %v932 = vpack.c.b16 %v899, %v896
          %v933 = vpack.c.b16 %v900, %v897
          %v934 = vpack.c.b16 %v904, %v901
          %v935 = vpack.c.b16 %v905, %v902
          %v936 = vpack.c.b16 %v906, %v903
          %v937 = vpack.c.b16 %v910, %v907
          %v938 = vpack.c.b16 %v911, %v908
          %v939 = vpack.c.b16 %v912, %v909
          %v940 = vpack.c.b16 %v916, %v913
          %v941 = vpack.c.b16 %v917, %v914
          %v942 = vpack.c.b16 %v918, %v915
          %967 = vmatprep.subr.bf16.mxu0 0
          %968 = vmatpush1.bf16.msra.mxu0 %v778
          %969 = vmatprep.subr.bf16.mxu0 0
          %970 = vmatpush1.bf16.msra.mxu0 %v777
          %971 = vmatprep.subr.bf16.mxu0 0
          %972 = vmatpush1.bf16.msra.mxu0 %v776
          %973 = vmatprep.subr.bf16.mxu0 0
          %974 = vmatpush1.bf16.msra.mxu0 %v775
          %975 = vmatprep.subr.bf16.mxu0 0
          %976 = vmatpush1.bf16.msra.mxu0 %v774
          %977 = vmatprep.subr.bf16.mxu0 0
          %978 = vmatpush1.bf16.msra.mxu0 %v773
          %979 = vmatprep.subr.bf16.mxu0 0
          %980 = vmatpush1.bf16.msra.mxu0 %v772
          %981 = vmatprep.subr.bf16.mxu0 0
          %982 = vmatpush1.bf16.msra.mxu0 %v771
          %983 = vmatprep.subr.bf16.mxu0 0
          %984 = vmatpush2.bf16.msra.mxu0 %v786
          %985 = vmatprep.subr.bf16.mxu0 0
          %986 = vmatpush2.bf16.msra.mxu0 %v785
          %987 = vmatprep.subr.bf16.mxu0 0
          %988 = vmatpush2.bf16.msra.mxu0 %v784
          %989 = vmatprep.subr.bf16.mxu0 0
          %990 = vmatpush2.bf16.msra.mxu0 %v783
          %991 = vmatprep.subr.bf16.mxu0 0
          %992 = vmatpush2.bf16.msra.mxu0 %v782
          %993 = vmatprep.subr.bf16.mxu0 0
          %994 = vmatpush2.bf16.msra.mxu0 %v781
          %995 = vmatprep.subr.bf16.mxu0 0
          %996 = vmatpush2.bf16.msra.mxu0 %v780
          %997 = vmatprep.subr.bf16.mxu0 0
          %998 = vmatpush2.bf16.msra.mxu0 %v779
          %999 = vmatprep.mubr.bf16.mxu0 %v920
          %1000 = vmatmul.mubr.bf16.gmra.mxu0 %v919
          %v1001 = vpop.f32.mrf.mxu0
          %v1002 = vadd.f32 0.0, %v1001
          %v1003 = vpop.f32.mrf.mxu0
          %v1004 = vpop.f32.mrf.mxu0
          %v1005 = vadd.f32 0.0, %v1004
          %v1006 = vpop.f32.mrf.mxu0
          %1007 = vmatprep.mubr.bf16.mxu0 %v923
          %1008 = vmatmul.mubr.bf16.gmra.mxu0 %v922
          %v1009 = vpop.f32.mrf.mxu0
          %v1010 = vadd.f32 0.0, %v1009
          %v1011 = vpop.f32.mrf.mxu0
          %v1012 = vpop.f32.mrf.mxu0
          %v1013 = vadd.f32 0.0, %v1012
          %v1014 = vpop.f32.mrf.mxu0
          %1015 = vmatprep.mubr.bf16.mxu0 %v926
          %1016 = vmatmul.mubr.bf16.gmra.mxu0 %v925
          %v1017 = vpop.f32.mrf.mxu0
          %v1018 = vadd.f32 0.0, %v1017
          %v1019 = vpop.f32.mrf.mxu0
          %v1020 = vpop.f32.mrf.mxu0
          %v1021 = vadd.f32 0.0, %v1020
          %v1022 = vpop.f32.mrf.mxu0
          %1023 = vmatprep.mubr.bf16.mxu0 %v929
          %1024 = vmatmul.mubr.bf16.gmra.mxu0 %v928
          %v1025 = vpop.f32.mrf.mxu0
          %v1026 = vadd.f32 0.0, %v1025
          %v1027 = vpop.f32.mrf.mxu0
          %v1028 = vpop.f32.mrf.mxu0
          %v1029 = vadd.f32 0.0, %v1028
          %v1030 = vpop.f32.mrf.mxu0
          %1031 = vmatprep.mubr.bf16.mxu0 %v932
          %1032 = vmatmul.mubr.bf16.gmra.mxu0 %v931
          %v1033 = vpop.f32.mrf.mxu0
          %v1034 = vadd.f32 0.0, %v1033
          %v1035 = vpop.f32.mrf.mxu0
          %v1036 = vpop.f32.mrf.mxu0
          %v1037 = vadd.f32 0.0, %v1036
          %v1038 = vpop.f32.mrf.mxu0
          %1039 = vmatprep.mubr.bf16.mxu0 %v935
          %1040 = vmatmul.mubr.bf16.gmra.mxu0 %v934
          %v1041 = vpop.f32.mrf.mxu0
          %v1042 = vadd.f32 0.0, %v1041
          %v1043 = vpop.f32.mrf.mxu0
          %v1044 = vpop.f32.mrf.mxu0
          %v1045 = vadd.f32 0.0, %v1044
          %v1046 = vpop.f32.mrf.mxu0
          %1047 = vmatprep.mubr.bf16.mxu0 %v938
          %1048 = vmatmul.mubr.bf16.gmra.mxu0 %v937
          %v1049 = vpop.f32.mrf.mxu0
          %v1050 = vadd.f32 0.0, %v1049
          %v1051 = vpop.f32.mrf.mxu0
          %v1052 = vpop.f32.mrf.mxu0
          %v1053 = vadd.f32 0.0, %v1052
          %v1054 = vpop.f32.mrf.mxu0
          %1055 = vmatprep.mubr.bf16.mxu0 %v941
          %1056 = vmatmul.mubr.bf16.gmra.mxu0 %v940
          %v1057 = vpop.f32.mrf.mxu0
          %v1058 = vadd.f32 0.0, %v1057
          %v1059 = vpop.f32.mrf.mxu0
          %v1060 = vpop.f32.mrf.mxu0
          %v1061 = vadd.f32 0.0, %v1060
          %v1062 = vpop.f32.mrf.mxu0
          %1063 = vdwg.mxu0
          %1064 = vmatprep.subr.bf16.mxu0 0
          %1065 = vmatpush1.bf16.msra.mxu0 %v794
          %1066 = vmatprep.subr.bf16.mxu0 0
          %1067 = vmatpush1.bf16.msra.mxu0 %v793
          %1068 = vmatprep.subr.bf16.mxu0 0
          %1069 = vmatpush1.bf16.msra.mxu0 %v792
          %1070 = vmatprep.subr.bf16.mxu0 0
          %1071 = vmatpush1.bf16.msra.mxu0 %v791
          %1072 = vmatprep.subr.bf16.mxu0 0
          %1073 = vmatpush1.bf16.msra.mxu0 %v790
          %1074 = vmatprep.subr.bf16.mxu0 0
          %1075 = vmatpush1.bf16.msra.mxu0 %v789
          %1076 = vmatprep.subr.bf16.mxu0 0
          %1077 = vmatpush1.bf16.msra.mxu0 %v788
          %1078 = vmatprep.subr.bf16.mxu0 0
          %1079 = vmatpush1.bf16.msra.mxu0 %v787
          %1080 = vmatprep.subr.bf16.mxu0 0
          %1081 = vmatpush2.bf16.msra.mxu0 0
          %1082 = vmatprep.subr.bf16.mxu0 0
          %1083 = vmatpush2.bf16.msra.mxu0 0
          %1084 = vmatprep.subr.bf16.mxu0 0
          %1085 = vmatpush2.bf16.msra.mxu0 0
          %1086 = vmatprep.subr.bf16.mxu0 0
          %1087 = vmatpush2.bf16.msra.mxu0 0
          %1088 = vmatprep.subr.bf16.mxu0 0
          %1089 = vmatpush2.bf16.msra.mxu0 0
          %1090 = vmatprep.subr.bf16.mxu0 0
          %1091 = vmatpush2.bf16.msra.mxu0 0
          %1092 = vmatprep.subr.bf16.mxu0 0
          %1093 = vmatpush2.bf16.msra.mxu0 0
          %1094 = vmatprep.subr.bf16.mxu0 0
          %1095 = vmatpush2.bf16.msra.mxu0 0
          %1096 = vmatprep.mubr.bf16.mxu0 0
          %1097 = vmatmul.mubr.bf16.gmra.mxu0 %v921
          %v1098 = vpop.f32.mrf.mxu0
          %v1099 = vadd.f32 %v1002, %v1098
          %v1100 = vpop.f32.mrf.mxu0
          %v1101 = vpop.f32.mrf.mxu0
          %v1102 = vadd.f32 %v1005, %v1101
          %v1103 = vpop.f32.mrf.mxu0
          %1104 = vmatprep.mubr.bf16.mxu0 0
          %1105 = vmatmul.mubr.bf16.gmra.mxu0 %v924
          %v1106 = vpop.f32.mrf.mxu0
          %v1107 = vadd.f32 %v1010, %v1106
          %v1108 = vpop.f32.mrf.mxu0
          %v1109 = vpop.f32.mrf.mxu0
          %v1110 = vadd.f32 %v1013, %v1109
          %v1111 = vpop.f32.mrf.mxu0
          %1112 = vmatprep.mubr.bf16.mxu0 0
          %1113 = vmatmul.mubr.bf16.gmra.mxu0 %v927
          %v1114 = vpop.f32.mrf.mxu0
          %v1115 = vadd.f32 %v1018, %v1114
          %v1116 = vpop.f32.mrf.mxu0
          %v1117 = vpop.f32.mrf.mxu0
          %v1118 = vadd.f32 %v1021, %v1117
          %v1119 = vpop.f32.mrf.mxu0
          %1120 = vmatprep.mubr.bf16.mxu0 0
          %1121 = vmatmul.mubr.bf16.gmra.mxu0 %v930
          %v1122 = vpop.f32.mrf.mxu0
          %v1123 = vadd.f32 %v1026, %v1122
          %v1124 = vpop.f32.mrf.mxu0
          %v1125 = vpop.f32.mrf.mxu0
          %v1126 = vadd.f32 %v1029, %v1125
          %v1127 = vpop.f32.mrf.mxu0
          %1128 = vmatprep.mubr.bf16.mxu0 0
          %1129 = vmatmul.mubr.bf16.gmra.mxu0 %v933
          %v1130 = vpop.f32.mrf.mxu0
          %v1131 = vadd.f32 %v1034, %v1130
          %v1132 = vpop.f32.mrf.mxu0
          %v1133 = vpop.f32.mrf.mxu0
          %v1134 = vadd.f32 %v1037, %v1133
          %v1135 = vpop.f32.mrf.mxu0
          %1136 = vmatprep.mubr.bf16.mxu0 0
          %1137 = vmatmul.mubr.bf16.gmra.mxu0 %v936
          %v1138 = vpop.f32.mrf.mxu0
          %v1139 = vadd.f32 %v1042, %v1138
          %v1140 = vpop.f32.mrf.mxu0
          %v1141 = vpop.f32.mrf.mxu0
          %v1142 = vadd.f32 %v1045, %v1141
          %v1143 = vpop.f32.mrf.mxu0
          %1144 = vmatprep.mubr.bf16.mxu0 0
          %1145 = vmatmul.mubr.bf16.gmra.mxu0 %v939
          %v1146 = vpop.f32.mrf.mxu0
          %v1147 = vadd.f32 %v1050, %v1146
          %v1148 = vpop.f32.mrf.mxu0
          %v1149 = vpop.f32.mrf.mxu0
          %v1150 = vadd.f32 %v1053, %v1149
          %v1151 = vpop.f32.mrf.mxu0
          %1152 = vmatprep.mubr.bf16.mxu0 0
          %1153 = vmatmul.mubr.bf16.gmra.mxu0 %v942
          %v1154 = vpop.f32.mrf.mxu0
          %v1155 = vadd.f32 %v1058, %v1154
          %v1156 = vpop.f32.mrf.mxu0
          %v1157 = vpop.f32.mrf.mxu0
          %v1158 = vadd.f32 %v1061, %v1157
          %v1159 = vpop.f32.mrf.mxu0
          %1160 = vdwg.mxu0
          %s1161 = scalar_lea.vmem [#allocation4], %s801
          %v1162 = vld [vmem:[%s1161] sm:$0xff]
          %v1163 = vld [vmem:[%s1161 + $0x8] sm:$0xff]
          %v1164 = vld [vmem:[%s1161 + $0x10] sm:$0xff]
          %v1165 = vld [vmem:[%s1161 + $0x18] sm:$0xff]
          %v1166 = vld [vmem:[%s1161 + $0x20] sm:$0xff]
          %v1167 = vld [vmem:[%s1161 + $0x28] sm:$0xff]
          %v1168 = vld [vmem:[%s1161 + $0x30] sm:$0xff]
          %v1169 = vld [vmem:[%s1161 + $0x38] sm:$0xff]
          %v1170 = vld [vmem:[%s1161 + $0x40] sm:$0xff]
          %v1171 = vld [vmem:[%s1161 + $0x48] sm:$0xff]
          %v1172 = vld [vmem:[%s1161 + $0x50] sm:$0xff]
          %v1173 = vld [vmem:[%s1161 + $0x58] sm:$0xff]
          %v1174 = vld [vmem:[%s1161 + $0x60] sm:$0xff]
          %v1175 = vld [vmem:[%s1161 + $0x68] sm:$0xff]
          %v1176 = vld [vmem:[%s1161 + $0x70] sm:$0xff]
          %v1177 = vld [vmem:[%s1161 + $0x78] sm:$0xff]
          %v1178 = vpack.c.bf16 %v1102, %v1099
          %v1179 = vpack.c.bf16 %v1110, %v1107
          %v1180 = vpack.c.bf16 %v1118, %v1115
          %v1181 = vpack.c.bf16 %v1126, %v1123
          %v1182 = vpack.c.bf16 %v1134, %v1131
          %v1183 = vpack.c.bf16 %v1142, %v1139
          %v1184 = vpack.c.bf16 %v1150, %v1147
          %v1185 = vpack.c.bf16 %v1158, %v1155
          %v1186 = vld [vmem:[%s234] sm:$0xf]
          %v1187 = vld [vmem:[%s234 + $0x4] sm:$0xf]
          %v1188 = vld [vmem:[%s234 + $0x8] sm:$0xf]
          %v1189 = vld [vmem:[%s234 + $0xc] sm:$0xf]
          %v1190 = vld [vmem:[%s234 + $0x10] sm:$0xf]
          %v1191 = vld [vmem:[%s234 + $0x14] sm:$0xf]
          %v1192 = vld [vmem:[%s234 + $0x18] sm:$0xf]
          %v1193 = vld [vmem:[%s234 + $0x1c] sm:$0xf]
          %v1194 = vld [vmem:[%s234 + $0x20] sm:$0xf]
          %v1195 = vld [vmem:[%s234 + $0x24] sm:$0xf]
          %v1196 = vld [vmem:[%s234 + $0x28] sm:$0xf]
          %v1197 = vld [vmem:[%s234 + $0x2c] sm:$0xf]
          %v1198 = vld [vmem:[%s234 + $0x30] sm:$0xf]
          %v1199 = vld [vmem:[%s234 + $0x34] sm:$0xf]
          %v1200 = vld [vmem:[%s234 + $0x38] sm:$0xf]
          %v1201 = vld [vmem:[%s234 + $0x3c] sm:$0xf]
          %v1202 = vpack.c.bf16 %v1163, %v1162
          %v1203 = vpack.c.bf16 %v1165, %v1164
          %v1204 = vpack.c.bf16 %v1167, %v1166
          %v1205 = vpack.c.bf16 %v1169, %v1168
          %v1206 = vpack.c.bf16 %v1171, %v1170
          %v1207 = vpack.c.bf16 %v1173, %v1172
          %v1208 = vpack.c.bf16 %v1175, %v1174
          %v1209 = vpack.c.bf16 %v1177, %v1176
          %v1210 = vld [vmem:[%s234 + $0x40] sm:$0xf]
          %v1211 = vld [vmem:[%s234 + $0x44] sm:$0xf]
          %v1212 = vld [vmem:[%s234 + $0x48] sm:$0xf]
          %v1213 = vld [vmem:[%s234 + $0x4c] sm:$0xf]
          %v1214 = vld [vmem:[%s234 + $0x50] sm:$0xf]
          %v1215 = vld [vmem:[%s234 + $0x54] sm:$0xf]
          %v1216 = vld [vmem:[%s234 + $0x58] sm:$0xf]
          %v1217 = vld [vmem:[%s234 + $0x5c] sm:$0xf]
          %v1218 = vld [vmem:[%s234 + $0x60] sm:$0xf]
          %v1219 = vld [vmem:[%s234 + $0x64] sm:$0xf]
          %v1220 = vld [vmem:[%s234 + $0x68] sm:$0xf]
          %v1221 = vld [vmem:[%s234 + $0x6c] sm:$0xf]
          %v1222 = vld [vmem:[%s234 + $0x70] sm:$0xf]
          %v1223 = vld [vmem:[%s234 + $0x74] sm:$0xf]
          %v1224 = vld [vmem:[%s234 + $0x78] sm:$0xf]
          %v1225 = vld [vmem:[%s234 + $0x7c] sm:$0xf]
          %v1242 = vunpack.c.l.b16 %v1210
          %v1243 = vunpack.c.l.b16 %v1211
          %v1244 = vunpack.c.l.b16 %v1212
          %v1245 = vunpack.c.l.b16 %v1213
          %v1246 = vunpack.c.l.b16 %v1214
          %v1247 = vunpack.c.l.b16 %v1215
          %v1248 = vunpack.c.l.b16 %v1216
          %v1249 = vunpack.c.l.b16 %v1217
          %v1250 = vunpack.c.l.b16 %v1218
          %v1251 = vunpack.c.l.b16 %v1219
          %v1252 = vunpack.c.l.b16 %v1220
          %v1253 = vunpack.c.l.b16 %v1221
          %v1254 = vunpack.c.l.b16 %v1222
          %v1255 = vunpack.c.l.b16 %v1223
          %v1256 = vunpack.c.l.b16 %v1224
          %v1257 = vunpack.c.l.b16 %v1225
          %v1258 = vpack.c.b16 %v1243, %v1242
          %v1259 = vpack.c.b16 %v1245, %v1244
          %v1260 = vpack.c.b16 %v1247, %v1246
          %v1261 = vpack.c.b16 %v1249, %v1248
          %v1262 = vpack.c.b16 %v1251, %v1250
          %v1263 = vpack.c.b16 %v1253, %v1252
          %v1264 = vpack.c.b16 %v1255, %v1254
          %v1265 = vpack.c.b16 %v1257, %v1256
          %1274 = vmatprep.subr.bf16.mxu0 0
          %1275 = vmatpush1.bf16.msra.mxu0 %v1265
          %1276 = vmatprep.subr.bf16.mxu0 0
          %1277 = vmatpush1.bf16.msra.mxu0 %v1264
          %1278 = vmatprep.subr.bf16.mxu0 0
          %1279 = vmatpush1.bf16.msra.mxu0 %v1263
          %1280 = vmatprep.subr.bf16.mxu0 0
          %1281 = vmatpush1.bf16.msra.mxu0 %v1262
          %1282 = vmatprep.subr.bf16.mxu0 0
          %1283 = vmatpush1.bf16.msra.mxu0 %v1261
          %1284 = vmatprep.subr.bf16.mxu0 0
          %1285 = vmatpush1.bf16.msra.mxu0 %v1260
          %1286 = vmatprep.subr.bf16.mxu0 0
          %1287 = vmatpush1.bf16.msra.mxu0 %v1259
          %1288 = vmatprep.subr.bf16.mxu0 0
          %1289 = vmatpush1.bf16.msra.mxu0 %v1258
          %1290 = vmatprep.subr.bf16.mxu0 0
          %1291 = vmatpush2.bf16.msra.mxu0 0
          %1292 = vmatprep.subr.bf16.mxu0 0
          %1293 = vmatpush2.bf16.msra.mxu0 0
          %1294 = vmatprep.subr.bf16.mxu0 0
          %1295 = vmatpush2.bf16.msra.mxu0 0
          %1296 = vmatprep.subr.bf16.mxu0 0
          %1297 = vmatpush2.bf16.msra.mxu0 0
          %1298 = vmatprep.subr.bf16.mxu0 0
          %1299 = vmatpush2.bf16.msra.mxu0 0
          %1300 = vmatprep.subr.bf16.mxu0 0
          %1301 = vmatpush2.bf16.msra.mxu0 0
          %1302 = vmatprep.subr.bf16.mxu0 0
          %1303 = vmatpush2.bf16.msra.mxu0 0
          %1304 = vmatprep.subr.bf16.mxu0 0
          %1305 = vmatpush2.bf16.msra.mxu0 0
          %1306 = vmatprep.mubr.bf16.mxu0 0
          %1307 = vmatmul.mubr.bf16.gmra.mxu0 %v1202
          %v1308 = vpop.f32.mrf.mxu0
          %v1309 = vadd.f32 0.0, %v1308
          %v1310 = vpop.f32.mrf.mxu0
          %v1311 = vpop.f32.mrf.mxu0
          %v1312 = vadd.f32 0.0, %v1311
          %v1313 = vpop.f32.mrf.mxu0
          %1314 = vmatprep.mubr.bf16.mxu0 0
          %1315 = vmatmul.mubr.bf16.gmra.mxu0 %v1203
          %v1316 = vpop.f32.mrf.mxu0
          %v1317 = vadd.f32 0.0, %v1316
          %v1318 = vpop.f32.mrf.mxu0
          %v1319 = vpop.f32.mrf.mxu0
          %v1320 = vadd.f32 0.0, %v1319
          %v1321 = vpop.f32.mrf.mxu0
          %1322 = vmatprep.mubr.bf16.mxu0 0
          %1323 = vmatmul.mubr.bf16.gmra.mxu0 %v1204
          %v1324 = vpop.f32.mrf.mxu0
          %v1325 = vadd.f32 0.0, %v1324
          %v1326 = vpop.f32.mrf.mxu0
          %v1327 = vpop.f32.mrf.mxu0
          %v1328 = vadd.f32 0.0, %v1327
          %v1329 = vpop.f32.mrf.mxu0
          %1330 = vmatprep.mubr.bf16.mxu0 0
          %1331 = vmatmul.mubr.bf16.gmra.mxu0 %v1205
          %v1332 = vpop.f32.mrf.mxu0
          %v1333 = vadd.f32 0.0, %v1332
          %v1334 = vpop.f32.mrf.mxu0
          %v1335 = vpop.f32.mrf.mxu0
          %v1336 = vadd.f32 0.0, %v1335
          %v1337 = vpop.f32.mrf.mxu0
          %1338 = vmatprep.mubr.bf16.mxu0 0
          %1339 = vmatmul.mubr.bf16.gmra.mxu0 %v1206
          %v1340 = vpop.f32.mrf.mxu0
          %v1341 = vadd.f32 0.0, %v1340
          %v1342 = vpop.f32.mrf.mxu0
          %v1343 = vpop.f32.mrf.mxu0
          %v1344 = vadd.f32 0.0, %v1343
          %v1345 = vpop.f32.mrf.mxu0
          %1346 = vmatprep.mubr.bf16.mxu0 0
          %1347 = vmatmul.mubr.bf16.gmra.mxu0 %v1207
          %v1348 = vpop.f32.mrf.mxu0
          %v1349 = vadd.f32 0.0, %v1348
          %v1350 = vpop.f32.mrf.mxu0
          %v1351 = vpop.f32.mrf.mxu0
          %v1352 = vadd.f32 0.0, %v1351
          %v1353 = vpop.f32.mrf.mxu0
          %1354 = vmatprep.mubr.bf16.mxu0 0
          %1355 = vmatmul.mubr.bf16.gmra.mxu0 %v1208
          %v1356 = vpop.f32.mrf.mxu0
          %v1357 = vadd.f32 0.0, %v1356
          %v1358 = vpop.f32.mrf.mxu0
          %v1359 = vpop.f32.mrf.mxu0
          %v1360 = vadd.f32 0.0, %v1359
          %v1361 = vpop.f32.mrf.mxu0
          %1362 = vmatprep.mubr.bf16.mxu0 0
          %1363 = vmatmul.mubr.bf16.gmra.mxu0 %v1209
          %v1364 = vpop.f32.mrf.mxu0
          %v1365 = vadd.f32 0.0, %v1364
          %v1366 = vpop.f32.mrf.mxu0
          %v1367 = vpop.f32.mrf.mxu0
          %v1368 = vadd.f32 0.0, %v1367
          %v1369 = vpop.f32.mrf.mxu0
          %1370 = vdwg.mxu0
          %v1387 = vunpack.c.l.b16 %v1186
          %v1388 = vunpack.c.l.b16 %v1187
          %v1389 = vunpack.c.l.b16 %v1188
          %v1390 = vunpack.c.l.b16 %v1189
          %v1391 = vunpack.c.l.b16 %v1190
          %v1392 = vunpack.c.l.b16 %v1191
          %v1393 = vunpack.c.l.b16 %v1192
          %v1394 = vunpack.c.l.b16 %v1193
          %v1395 = vunpack.c.l.b16 %v1194
          %v1396 = vunpack.c.l.b16 %v1195
          %v1397 = vunpack.c.l.b16 %v1196
          %v1398 = vunpack.c.l.b16 %v1197
          %v1399 = vunpack.c.l.b16 %v1198
          %v1400 = vunpack.c.l.b16 %v1199
          %v1401 = vunpack.c.l.b16 %v1200
          %v1402 = vunpack.c.l.b16 %v1201
          %v1403 = vpack.c.b16 %v1388, %v1387
          %v1404 = vpack.c.b16 %v1390, %v1389
          %v1405 = vpack.c.b16 %v1392, %v1391
          %v1406 = vpack.c.b16 %v1394, %v1393
          %v1407 = vpack.c.b16 %v1396, %v1395
          %v1408 = vpack.c.b16 %v1398, %v1397
          %v1409 = vpack.c.b16 %v1400, %v1399
          %v1410 = vpack.c.b16 %v1402, %v1401
          %1419 = vmatprep.subr.bf16.mxu0 0
          %1420 = vmatpush1.bf16.msra.mxu0 %v1410
          %1421 = vmatprep.subr.bf16.mxu0 0
          %1422 = vmatpush1.bf16.msra.mxu0 %v1409
          %1423 = vmatprep.subr.bf16.mxu0 0
          %1424 = vmatpush1.bf16.msra.mxu0 %v1408
          %1425 = vmatprep.subr.bf16.mxu0 0
          %1426 = vmatpush1.bf16.msra.mxu0 %v1407
          %1427 = vmatprep.subr.bf16.mxu0 0
          %1428 = vmatpush1.bf16.msra.mxu0 %v1406
          %1429 = vmatprep.subr.bf16.mxu0 0
          %1430 = vmatpush1.bf16.msra.mxu0 %v1405
          %1431 = vmatprep.subr.bf16.mxu0 0
          %1432 = vmatpush1.bf16.msra.mxu0 %v1404
          %1433 = vmatprep.subr.bf16.mxu0 0
          %1434 = vmatpush1.bf16.msra.mxu0 %v1403
          %1435 = vmatprep.subr.bf16.mxu0 0
          %1436 = vmatpush2.bf16.msra.mxu0 0
          %1437 = vmatprep.subr.bf16.mxu0 0
          %1438 = vmatpush2.bf16.msra.mxu0 0
          %1439 = vmatprep.subr.bf16.mxu0 0
          %1440 = vmatpush2.bf16.msra.mxu0 0
          %1441 = vmatprep.subr.bf16.mxu0 0
          %1442 = vmatpush2.bf16.msra.mxu0 0
          %1443 = vmatprep.subr.bf16.mxu0 0
          %1444 = vmatpush2.bf16.msra.mxu0 0
          %1445 = vmatprep.subr.bf16.mxu0 0
          %1446 = vmatpush2.bf16.msra.mxu0 0
          %1447 = vmatprep.subr.bf16.mxu0 0
          %1448 = vmatpush2.bf16.msra.mxu0 0
          %1449 = vmatprep.subr.bf16.mxu0 0
          %1450 = vmatpush2.bf16.msra.mxu0 0
          %1451 = vmatprep.mubr.bf16.mxu0 0
          %1452 = vmatmul.mubr.bf16.gmra.mxu0 %v1178
          %v1453 = vpop.f32.mrf.mxu0
          %v1454 = vadd.f32 %v1309, %v1453
          %v1455 = vpop.f32.mrf.mxu0
          %v1456 = vpop.f32.mrf.mxu0
          %v1457 = vadd.f32 %v1312, %v1456
          %v1458 = vpop.f32.mrf.mxu0
          %1459 = vmatprep.mubr.bf16.mxu0 0
          %1460 = vmatmul.mubr.bf16.gmra.mxu0 %v1179
          %v1461 = vpop.f32.mrf.mxu0
          %v1462 = vadd.f32 %v1317, %v1461
          %v1463 = vpop.f32.mrf.mxu0
          %v1464 = vpop.f32.mrf.mxu0
          %v1465 = vadd.f32 %v1320, %v1464
          %v1466 = vpop.f32.mrf.mxu0
          %1467 = vmatprep.mubr.bf16.mxu0 0
          %1468 = vmatmul.mubr.bf16.gmra.mxu0 %v1180
          %v1469 = vpop.f32.mrf.mxu0
          %v1470 = vadd.f32 %v1325, %v1469
          %v1471 = vpop.f32.mrf.mxu0
          %v1472 = vpop.f32.mrf.mxu0
          %v1473 = vadd.f32 %v1328, %v1472
          %v1474 = vpop.f32.mrf.mxu0
          %1475 = vmatprep.mubr.bf16.mxu0 0
          %1476 = vmatmul.mubr.bf16.gmra.mxu0 %v1181
          %v1477 = vpop.f32.mrf.mxu0
          %v1478 = vadd.f32 %v1333, %v1477
          %v1479 = vpop.f32.mrf.mxu0
          %v1480 = vpop.f32.mrf.mxu0
          %v1481 = vadd.f32 %v1336, %v1480
          %v1482 = vpop.f32.mrf.mxu0
          %1483 = vmatprep.mubr.bf16.mxu0 0
          %1484 = vmatmul.mubr.bf16.gmra.mxu0 %v1182
          %v1485 = vpop.f32.mrf.mxu0
          %v1486 = vadd.f32 %v1341, %v1485
          %v1487 = vpop.f32.mrf.mxu0
          %v1488 = vpop.f32.mrf.mxu0
          %v1489 = vadd.f32 %v1344, %v1488
          %v1490 = vpop.f32.mrf.mxu0
          %1491 = vmatprep.mubr.bf16.mxu0 0
          %1492 = vmatmul.mubr.bf16.gmra.mxu0 %v1183
          %v1493 = vpop.f32.mrf.mxu0
          %v1494 = vadd.f32 %v1349, %v1493
          %v1495 = vpop.f32.mrf.mxu0
          %v1496 = vpop.f32.mrf.mxu0
          %v1497 = vadd.f32 %v1352, %v1496
          %v1498 = vpop.f32.mrf.mxu0
          %1499 = vmatprep.mubr.bf16.mxu0 0
          %1500 = vmatmul.mubr.bf16.gmra.mxu0 %v1184
          %v1501 = vpop.f32.mrf.mxu0
          %v1502 = vadd.f32 %v1357, %v1501
          %v1503 = vpop.f32.mrf.mxu0
          %v1504 = vpop.f32.mrf.mxu0
          %v1505 = vadd.f32 %v1360, %v1504
          %v1506 = vpop.f32.mrf.mxu0
          %1507 = vmatprep.mubr.bf16.mxu0 0
          %1508 = vmatmul.mubr.bf16.gmra.mxu0 %v1185
          %v1509 = vpop.f32.mrf.mxu0
          %v1510 = vadd.f32 %v1365, %v1509
          %v1511 = vpop.f32.mrf.mxu0
          %v1512 = vpop.f32.mrf.mxu0
          %v1513 = vadd.f32 %v1368, %v1512
          %v1514 = vpop.f32.mrf.mxu0
          %1515 = vdwg.mxu0
          %v1516 = vmul.f32 %v1099, 0.9
          %v1517 = vmul.f32 %v1102, 0.9
          %v1518 = vmul.f32 %v1107, 0.9
          %v1519 = vmul.f32 %v1110, 0.9
          %v1520 = vmul.f32 %v1115, 0.9
          %v1521 = vmul.f32 %v1118, 0.9
          %v1522 = vmul.f32 %v1123, 0.9
          %v1523 = vmul.f32 %v1126, 0.9
          %v1524 = vmul.f32 %v1131, 0.9
          %v1525 = vmul.f32 %v1134, 0.9
          %v1526 = vmul.f32 %v1139, 0.9
          %v1527 = vmul.f32 %v1142, 0.9
          %v1528 = vmul.f32 %v1147, 0.9
          %v1529 = vmul.f32 %v1150, 0.9
          %v1530 = vmul.f32 %v1155, 0.9
          %v1531 = vmul.f32 %v1158, 0.9
          %v1532 = vmul.f32 %v1162, 0.1
          %v1533 = vmul.f32 %v1163, 0.1
          %v1534 = vmul.f32 %v1164, 0.1
          %v1535 = vmul.f32 %v1165, 0.1
          %v1536 = vmul.f32 %v1166, 0.1
          %v1537 = vmul.f32 %v1167, 0.1
          %v1538 = vmul.f32 %v1168, 0.1
          %v1539 = vmul.f32 %v1169, 0.1
          %v1540 = vmul.f32 %v1170, 0.1
          %v1541 = vmul.f32 %v1171, 0.1
          %v1542 = vmul.f32 %v1172, 0.1
          %v1543 = vmul.f32 %v1173, 0.1
          %v1544 = vmul.f32 %v1174, 0.1
          %v1545 = vmul.f32 %v1175, 0.1
          %v1546 = vmul.f32 %v1176, 0.1
          %v1547 = vmul.f32 %v1177, 0.1
          %v1548 = vadd.f32 %v1516, %v1532
          %v1549 = vadd.f32 %v1517, %v1533
          %v1550 = vadd.f32 %v1518, %v1534
          %v1551 = vadd.f32 %v1519, %v1535
          %v1552 = vadd.f32 %v1520, %v1536
          %v1553 = vadd.f32 %v1521, %v1537
          %v1554 = vadd.f32 %v1522, %v1538
          %v1555 = vadd.f32 %v1523, %v1539
          %v1556 = vadd.f32 %v1524, %v1540
          %v1557 = vadd.f32 %v1525, %v1541
          %v1558 = vadd.f32 %v1526, %v1542
          %v1559 = vadd.f32 %v1527, %v1543
          %v1560 = vadd.f32 %v1528, %v1544
          %v1561 = vadd.f32 %v1529, %v1545
          %v1562 = vadd.f32 %v1530, %v1546
          %v1563 = vadd.f32 %v1531, %v1547
          %v1564 = vstv %s721
          %v1565 = vmul.f32 %v1564, %v1454
          %v1566 = vmul.f32 %v1564, %v1457
          %v1567 = vmul.f32 %v1564, %v1462
          %v1568 = vmul.f32 %v1564, %v1465
          %v1569 = vmul.f32 %v1564, %v1470
          %v1570 = vmul.f32 %v1564, %v1473
          %v1571 = vmul.f32 %v1564, %v1478
          %v1572 = vmul.f32 %v1564, %v1481
          %v1573 = vmul.f32 %v1564, %v1486
          %v1574 = vmul.f32 %v1564, %v1489
          %v1575 = vmul.f32 %v1564, %v1494
          %v1576 = vmul.f32 %v1564, %v1497
          %v1577 = vmul.f32 %v1564, %v1502
          %v1578 = vmul.f32 %v1564, %v1505
          %v1579 = vmul.f32 %v1564, %v1510
          %v1580 = vmul.f32 %v1564, %v1513
          %v1581 = vstv %s722
          %v1582 = vmul.f32 %v1581, %v1548
          %v1583 = vmul.f32 %v1581, %v1549
          %v1584 = vmul.f32 %v1581, %v1550
          %v1585 = vmul.f32 %v1581, %v1551
          %v1586 = vmul.f32 %v1581, %v1552
          %v1587 = vmul.f32 %v1581, %v1553
          %v1588 = vmul.f32 %v1581, %v1554
          %v1589 = vmul.f32 %v1581, %v1555
          %v1590 = vmul.f32 %v1581, %v1556
          %v1591 = vmul.f32 %v1581, %v1557
          %v1592 = vmul.f32 %v1581, %v1558
          %v1593 = vmul.f32 %v1581, %v1559
          %v1594 = vmul.f32 %v1581, %v1560
          %v1595 = vmul.f32 %v1581, %v1561
          %v1596 = vmul.f32 %v1581, %v1562
          %v1597 = vmul.f32 %v1581, %v1563
          %v1598 = vadd.f32 %v1565, %v1582
          %v1599 = vadd.f32 %v1566, %v1583
          %v1600 = vadd.f32 %v1567, %v1584
          %v1601 = vadd.f32 %v1568, %v1585
          %v1602 = vadd.f32 %v1569, %v1586
          %v1603 = vadd.f32 %v1570, %v1587
          %v1604 = vadd.f32 %v1571, %v1588
          %v1605 = vadd.f32 %v1572, %v1589
          %v1606 = vadd.f32 %v1573, %v1590
          %v1607 = vadd.f32 %v1574, %v1591
          %v1608 = vadd.f32 %v1575, %v1592
          %v1609 = vadd.f32 %v1576, %v1593
          %v1610 = vadd.f32 %v1577, %v1594
          %v1611 = vadd.f32 %v1578, %v1595
          %v1612 = vadd.f32 %v1579, %v1596
          %v1613 = vadd.f32 %v1580, %v1597
          %s1614 = scalar_lea.vmem [#allocation3], %s801
          %v1615 = vld [vmem:[%s1614] sm:$0xff]
          %v1616 = vld [vmem:[%s1614 + $0x8] sm:$0xff]
          %v1617 = vld [vmem:[%s1614 + $0x10] sm:$0xff]
          %v1618 = vld [vmem:[%s1614 + $0x18] sm:$0xff]
          %v1619 = vld [vmem:[%s1614 + $0x20] sm:$0xff]
          %v1620 = vld [vmem:[%s1614 + $0x28] sm:$0xff]
          %v1621 = vld [vmem:[%s1614 + $0x30] sm:$0xff]
          %v1622 = vld [vmem:[%s1614 + $0x38] sm:$0xff]
          %v1623 = vld [vmem:[%s1614 + $0x40] sm:$0xff]
          %v1624 = vld [vmem:[%s1614 + $0x48] sm:$0xff]
          %v1625 = vld [vmem:[%s1614 + $0x50] sm:$0xff]
          %v1626 = vld [vmem:[%s1614 + $0x58] sm:$0xff]
          %v1627 = vld [vmem:[%s1614 + $0x60] sm:$0xff]
          %v1628 = vld [vmem:[%s1614 + $0x68] sm:$0xff]
          %v1629 = vld [vmem:[%s1614 + $0x70] sm:$0xff]
          %v1630 = vld [vmem:[%s1614 + $0x78] sm:$0xff]
          %v1631 = vadd.f32 %v1598, %v1615
          %v1632 = vadd.f32 %v1599, %v1616
          %v1633 = vadd.f32 %v1600, %v1617
          %v1634 = vadd.f32 %v1601, %v1618
          %v1635 = vadd.f32 %v1602, %v1619
          %v1636 = vadd.f32 %v1603, %v1620
          %v1637 = vadd.f32 %v1604, %v1621
          %v1638 = vadd.f32 %v1605, %v1622
          %v1639 = vadd.f32 %v1606, %v1623
          %v1640 = vadd.f32 %v1607, %v1624
          %v1641 = vadd.f32 %v1608, %v1625
          %v1642 = vadd.f32 %v1609, %v1626
          %v1643 = vadd.f32 %v1610, %v1627
          %v1644 = vadd.f32 %v1611, %v1628
          %v1645 = vadd.f32 %v1612, %v1629
          %v1646 = vadd.f32 %v1613, %v1630
          %v1647 = vmax.f32 %v1631, 0.0
          %v1648 = vmax.f32 %v1632, 0.0
          %v1649 = vmax.f32 %v1633, 0.0
          %v1650 = vmax.f32 %v1634, 0.0
          %v1651 = vmax.f32 %v1635, 0.0
          %v1652 = vmax.f32 %v1636, 0.0
          %v1653 = vmax.f32 %v1637, 0.0
          %v1654 = vmax.f32 %v1638, 0.0
          %v1655 = vmax.f32 %v1639, 0.0
          %v1656 = vmax.f32 %v1640, 0.0
          %v1657 = vmax.f32 %v1641, 0.0
          %v1658 = vmax.f32 %v1642, 0.0
          %v1659 = vmax.f32 %v1643, 0.0
          %v1660 = vmax.f32 %v1644, 0.0
          %v1661 = vmax.f32 %v1645, 0.0
          %v1662 = vmax.f32 %v1646, 0.0
          %s1663 = scalar_lea.vmem [#allocation5], %s801
          %1664 = vst [vmem:[%s1663] sm:$0xff] %v1647
          %1665 = vst [vmem:[%s1663 + $0x8] sm:$0xff] %v1648
          %1666 = vst [vmem:[%s1663 + $0x10] sm:$0xff] %v1649
          %1667 = vst [vmem:[%s1663 + $0x18] sm:$0xff] %v1650
          %1668 = vst [vmem:[%s1663 + $0x20] sm:$0xff] %v1651
          %1669 = vst [vmem:[%s1663 + $0x28] sm:$0xff] %v1652
          %1670 = vst [vmem:[%s1663 + $0x30] sm:$0xff] %v1653
          %1671 = vst [vmem:[%s1663 + $0x38] sm:$0xff] %v1654
          %1672 = vst [vmem:[%s1663 + $0x40] sm:$0xff] %v1655
          %1673 = vst [vmem:[%s1663 + $0x48] sm:$0xff] %v1656
          %1674 = vst [vmem:[%s1663 + $0x50] sm:$0xff] %v1657
          %1675 = vst [vmem:[%s1663 + $0x58] sm:$0xff] %v1658
          %1676 = vst [vmem:[%s1663 + $0x60] sm:$0xff] %v1659
          %1677 = vst [vmem:[%s1663 + $0x68] sm:$0xff] %v1660
          %1678 = vst [vmem:[%s1663 + $0x70] sm:$0xff] %v1661
          %1679 = vst [vmem:[%s1663 + $0x78] sm:$0xff] %v1662
        $region74: #{tpu_custom_call.1} parent=39 // loop_footer
          %s800 = sadd.s32 1, %s796
        $region75: #{tpu_custom_call.1} parent=39 // loop_footer_branch
          %795 = sbr.rel target = $region71
        $region76: #{tpu_custom_call.1} parent=39 // loop_exit
          _
        %v1680 = vld [vmem:[#allocation5] sm:$0xff]
        %v1681 = vld [vmem:[#allocation5 + $0x8] sm:$0xff]
        %v1682 = vld [vmem:[#allocation5 + $0x10] sm:$0xff]
        %v1683 = vld [vmem:[#allocation5 + $0x18] sm:$0xff]
        %v1684 = vld [vmem:[#allocation5 + $0x20] sm:$0xff]
        %v1685 = vld [vmem:[#allocation5 + $0x28] sm:$0xff]
        %v1686 = vld [vmem:[#allocation5 + $0x30] sm:$0xff]
        %v1687 = vld [vmem:[#allocation5 + $0x38] sm:$0xff]
        %v1688 = vld [vmem:[#allocation5 + $0x40] sm:$0xff]
        %v1689 = vld [vmem:[#allocation5 + $0x48] sm:$0xff]
        %v1690 = vld [vmem:[#allocation5 + $0x50] sm:$0xff]
        %v1691 = vld [vmem:[#allocation5 + $0x58] sm:$0xff]
        %v1692 = vld [vmem:[#allocation5 + $0x60] sm:$0xff]
        %v1693 = vld [vmem:[#allocation5 + $0x68] sm:$0xff]
        %v1694 = vld [vmem:[#allocation5 + $0x70] sm:$0xff]
        %v1695 = vld [vmem:[#allocation5 + $0x78] sm:$0xff]
        %v1696 = vld [vmem:[#allocation5 + $0x80] sm:$0xff]
        %v1697 = vld [vmem:[#allocation5 + $0x88] sm:$0xff]
        %v1698 = vld [vmem:[#allocation5 + $0x90] sm:$0xff]
        %v1699 = vld [vmem:[#allocation5 + $0x98] sm:$0xff]
        %v1700 = vld [vmem:[#allocation5 + $0xa0] sm:$0xff]
        %v1701 = vld [vmem:[#allocation5 + $0xa8] sm:$0xff]
        %v1702 = vld [vmem:[#allocation5 + $0xb0] sm:$0xff]
        %v1703 = vld [vmem:[#allocation5 + $0xb8] sm:$0xff]
        %v1704 = vld [vmem:[#allocation5 + $0xc0] sm:$0xff]
        %v1705 = vld [vmem:[#allocation5 + $0xc8] sm:$0xff]
        %v1706 = vld [vmem:[#allocation5 + $0xd0] sm:$0xff]
        %v1707 = vld [vmem:[#allocation5 + $0xd8] sm:$0xff]
        %v1708 = vld [vmem:[#allocation5 + $0xe0] sm:$0xff]
        %v1709 = vld [vmem:[#allocation5 + $0xe8] sm:$0xff]
        %v1710 = vld [vmem:[#allocation5 + $0xf0] sm:$0xff]
        %v1711 = vld [vmem:[#allocation5 + $0xf8] sm:$0xff]
        %v1712 = vld [vmem:[#allocation5 + $0x100] sm:$0xff]
        %v1713 = vld [vmem:[#allocation5 + $0x108] sm:$0xff]
        %v1714 = vld [vmem:[#allocation5 + $0x110] sm:$0xff]
        %v1715 = vld [vmem:[#allocation5 + $0x118] sm:$0xff]
        %v1716 = vld [vmem:[#allocation5 + $0x120] sm:$0xff]
        %v1717 = vld [vmem:[#allocation5 + $0x128] sm:$0xff]
        %v1718 = vld [vmem:[#allocation5 + $0x130] sm:$0xff]
        %v1719 = vld [vmem:[#allocation5 + $0x138] sm:$0xff]
        %v1720 = vld [vmem:[#allocation5 + $0x140] sm:$0xff]
        %v1721 = vld [vmem:[#allocation5 + $0x148] sm:$0xff]
        %v1722 = vld [vmem:[#allocation5 + $0x150] sm:$0xff]
        %v1723 = vld [vmem:[#allocation5 + $0x158] sm:$0xff]
        %v1724 = vld [vmem:[#allocation5 + $0x160] sm:$0xff]
        %v1725 = vld [vmem:[#allocation5 + $0x168] sm:$0xff]
        %v1726 = vld [vmem:[#allocation5 + $0x170] sm:$0xff]
        %v1727 = vld [vmem:[#allocation5 + $0x178] sm:$0xff]
        %1728 = vst [vmem:[#allocation3] sm:$0xff] %v1680
        %1729 = vst [vmem:[#allocation3 + $0x8] sm:$0xff] %v1681
        %1730 = vst [vmem:[#allocation3 + $0x10] sm:$0xff] %v1682
        %1731 = vst [vmem:[#allocation3 + $0x18] sm:$0xff] %v1683
        %1732 = vst [vmem:[#allocation3 + $0x20] sm:$0xff] %v1684
        %1733 = vst [vmem:[#allocation3 + $0x28] sm:$0xff] %v1685
        %1734 = vst [vmem:[#allocation3 + $0x30] sm:$0xff] %v1686
        %1735 = vst [vmem:[#allocation3 + $0x38] sm:$0xff] %v1687
        %1736 = vst [vmem:[#allocation3 + $0x40] sm:$0xff] %v1688
        %1737 = vst [vmem:[#allocation3 + $0x48] sm:$0xff] %v1689
        %1738 = vst [vmem:[#allocation3 + $0x50] sm:$0xff] %v1690
        %1739 = vst [vmem:[#allocation3 + $0x58] sm:$0xff] %v1691
        %1740 = vst [vmem:[#allocation3 + $0x60] sm:$0xff] %v1692
        %1741 = vst [vmem:[#allocation3 + $0x68] sm:$0xff] %v1693
        %1742 = vst [vmem:[#allocation3 + $0x70] sm:$0xff] %v1694
        %1743 = vst [vmem:[#allocation3 + $0x78] sm:$0xff] %v1695
        %1744 = vst [vmem:[#allocation3 + $0x80] sm:$0xff] %v1696
        %1745 = vst [vmem:[#allocation3 + $0x88] sm:$0xff] %v1697
        %1746 = vst [vmem:[#allocation3 + $0x90] sm:$0xff] %v1698
        %1747 = vst [vmem:[#allocation3 + $0x98] sm:$0xff] %v1699
        %1748 = vst [vmem:[#allocation3 + $0xa0] sm:$0xff] %v1700
        %1749 = vst [vmem:[#allocation3 + $0xa8] sm:$0xff] %v1701
        %1750 = vst [vmem:[#allocation3 + $0xb0] sm:$0xff] %v1702
        %1751 = vst [vmem:[#allocation3 + $0xb8] sm:$0xff] %v1703
        %1752 = vst [vmem:[#allocation3 + $0xc0] sm:$0xff] %v1704
        %1753 = vst [vmem:[#allocation3 + $0xc8] sm:$0xff] %v1705
        %1754 = vst [vmem:[#allocation3 + $0xd0] sm:$0xff] %v1706
        %1755 = vst [vmem:[#allocation3 + $0xd8] sm:$0xff] %v1707
        %1756 = vst [vmem:[#allocation3 + $0xe0] sm:$0xff] %v1708
        %1757 = vst [vmem:[#allocation3 + $0xe8] sm:$0xff] %v1709
        %1758 = vst [vmem:[#allocation3 + $0xf0] sm:$0xff] %v1710
        %1759 = vst [vmem:[#allocation3 + $0xf8] sm:$0xff] %v1711
        %1760 = vst [vmem:[#allocation3 + $0x100] sm:$0xff] %v1712
        %1761 = vst [vmem:[#allocation3 + $0x108] sm:$0xff] %v1713
        %1762 = vst [vmem:[#allocation3 + $0x110] sm:$0xff] %v1714
        %1763 = vst [vmem:[#allocation3 + $0x118] sm:$0xff] %v1715
        %1764 = vst [vmem:[#allocation3 + $0x120] sm:$0xff] %v1716
        %1765 = vst [vmem:[#allocation3 + $0x128] sm:$0xff] %v1717
        %1766 = vst [vmem:[#allocation3 + $0x130] sm:$0xff] %v1718
        %1767 = vst [vmem:[#allocation3 + $0x138] sm:$0xff] %v1719
        %1768 = vst [vmem:[#allocation3 + $0x140] sm:$0xff] %v1720
        %1769 = vst [vmem:[#allocation3 + $0x148] sm:$0xff] %v1721
        %1770 = vst [vmem:[#allocation3 + $0x150] sm:$0xff] %v1722
        %1771 = vst [vmem:[#allocation3 + $0x158] sm:$0xff] %v1723
        %1772 = vst [vmem:[#allocation3 + $0x160] sm:$0xff] %v1724
        %1773 = vst [vmem:[#allocation3 + $0x168] sm:$0xff] %v1725
        %1774 = vst [vmem:[#allocation3 + $0x170] sm:$0xff] %v1726
        %1775 = vst [vmem:[#allocation3 + $0x178] sm:$0xff] %v1727
        %p1776 = scmp.eq.s32.totalorder %s25, 7
        // Predicated region
        $region77: #{tpu_custom_call.1} parent=39 // pred_check
          %p1777 = pneg %p1776
        $region78: #{tpu_custom_call.1} parent=39 // pred_check_branch
          %1779 = sbr.rel (%p1777) target = $region80
        $region79: #{tpu_custom_call.1} parent=39 // pred_region
          %v1780 = vld [vmem:[#allocation3] sm:$0xff]
          %v1781 = vld [vmem:[#allocation3 + $0x8] sm:$0xff]
          %v1782 = vld [vmem:[#allocation3 + $0x10] sm:$0xff]
          %v1783 = vld [vmem:[#allocation3 + $0x18] sm:$0xff]
          %v1784 = vld [vmem:[#allocation3 + $0x20] sm:$0xff]
          %v1785 = vld [vmem:[#allocation3 + $0x28] sm:$0xff]
          %v1786 = vld [vmem:[#allocation3 + $0x30] sm:$0xff]
          %v1787 = vld [vmem:[#allocation3 + $0x38] sm:$0xff]
          %v1788 = vld [vmem:[#allocation3 + $0x40] sm:$0xff]
          %v1789 = vld [vmem:[#allocation3 + $0x48] sm:$0xff]
          %v1790 = vld [vmem:[#allocation3 + $0x50] sm:$0xff]
          %v1791 = vld [vmem:[#allocation3 + $0x58] sm:$0xff]
          %v1792 = vld [vmem:[#allocation3 + $0x60] sm:$0xff]
          %v1793 = vld [vmem:[#allocation3 + $0x68] sm:$0xff]
          %v1794 = vld [vmem:[#allocation3 + $0x70] sm:$0xff]
          %v1795 = vld [vmem:[#allocation3 + $0x78] sm:$0xff]
          %v1796 = vld [vmem:[#allocation3 + $0x80] sm:$0xff]
          %v1797 = vld [vmem:[#allocation3 + $0x88] sm:$0xff]
          %v1798 = vld [vmem:[#allocation3 + $0x90] sm:$0xff]
          %v1799 = vld [vmem:[#allocation3 + $0x98] sm:$0xff]
          %v1800 = vld [vmem:[#allocation3 + $0xa0] sm:$0xff]
          %v1801 = vld [vmem:[#allocation3 + $0xa8] sm:$0xff]
          %v1802 = vld [vmem:[#allocation3 + $0xb0] sm:$0xff]
          %v1803 = vld [vmem:[#allocation3 + $0xb8] sm:$0xff]
          %v1804 = vld [vmem:[#allocation3 + $0xc0] sm:$0xff]
          %v1805 = vld [vmem:[#allocation3 + $0xc8] sm:$0xff]
          %v1806 = vld [vmem:[#allocation3 + $0xd0] sm:$0xff]
          %v1807 = vld [vmem:[#allocation3 + $0xd8] sm:$0xff]
          %v1808 = vld [vmem:[#allocation3 + $0xe0] sm:$0xff]
          %v1809 = vld [vmem:[#allocation3 + $0xe8] sm:$0xff]
          %v1810 = vld [vmem:[#allocation3 + $0xf0] sm:$0xff]
          %v1811 = vld [vmem:[#allocation3 + $0xf8] sm:$0xff]
          %v1812 = vld [vmem:[#allocation3 + $0x100] sm:$0xff]
          %v1813 = vld [vmem:[#allocation3 + $0x108] sm:$0xff]
          %v1814 = vld [vmem:[#allocation3 + $0x110] sm:$0xff]
          %v1815 = vld [vmem:[#allocation3 + $0x118] sm:$0xff]
          %v1816 = vld [vmem:[#allocation3 + $0x120] sm:$0xff]
          %v1817 = vld [vmem:[#allocation3 + $0x128] sm:$0xff]
          %v1818 = vld [vmem:[#allocation3 + $0x130] sm:$0xff]
          %v1819 = vld [vmem:[#allocation3 + $0x138] sm:$0xff]
          %v1820 = vld [vmem:[#allocation3 + $0x140] sm:$0xff]
          %v1821 = vld [vmem:[#allocation3 + $0x148] sm:$0xff]
          %v1822 = vld [vmem:[#allocation3 + $0x150] sm:$0xff]
          %v1823 = vld [vmem:[#allocation3 + $0x158] sm:$0xff]
          %v1824 = vld [vmem:[#allocation3 + $0x160] sm:$0xff]
          %v1825 = vld [vmem:[#allocation3 + $0x168] sm:$0xff]
          %v1826 = vld [vmem:[#allocation3 + $0x170] sm:$0xff]
          %v1827 = vld [vmem:[#allocation3 + $0x178] sm:$0xff]
          %v1828 = vpack.c.bf16 %v1781, %v1780
          %v1829 = vpack.c.bf16 %v1783, %v1782
          %v1830 = vpack.c.bf16 %v1785, %v1784
          %v1831 = vpack.c.bf16 %v1787, %v1786
          %v1832 = vpack.c.bf16 %v1789, %v1788
          %v1833 = vpack.c.bf16 %v1791, %v1790
          %v1834 = vpack.c.bf16 %v1793, %v1792
          %v1835 = vpack.c.bf16 %v1795, %v1794
          %v1836 = vpack.c.bf16 %v1797, %v1796
          %v1837 = vpack.c.bf16 %v1799, %v1798
          %v1838 = vpack.c.bf16 %v1801, %v1800
          %v1839 = vpack.c.bf16 %v1803, %v1802
          %v1840 = vpack.c.bf16 %v1805, %v1804
          %v1841 = vpack.c.bf16 %v1807, %v1806
          %v1842 = vpack.c.bf16 %v1809, %v1808
          %v1843 = vpack.c.bf16 %v1811, %v1810
          %v1844 = vpack.c.bf16 %v1813, %v1812
          %v1845 = vpack.c.bf16 %v1815, %v1814
          %v1846 = vpack.c.bf16 %v1817, %v1816
          %v1847 = vpack.c.bf16 %v1819, %v1818
          %v1848 = vpack.c.bf16 %v1821, %v1820
          %v1849 = vpack.c.bf16 %v1823, %v1822
          %v1850 = vpack.c.bf16 %v1825, %v1824
          %v1851 = vpack.c.bf16 %v1827, %v1826
          %v1852 = vld [vmem:[#allocation12] sm:$0xf]
          %v1853 = vld [vmem:[#allocation12 + $0x4] sm:$0xf]
          %v1854 = vld [vmem:[#allocation12 + $0x8] sm:$0xf]
          %v1855 = vld [vmem:[#allocation12 + $0xc] sm:$0xf]
          %v1856 = vld [vmem:[#allocation12 + $0x10] sm:$0xf]
          %v1857 = vld [vmem:[#allocation12 + $0x14] sm:$0xf]
          %v1858 = vld [vmem:[#allocation12 + $0x18] sm:$0xf]
          %v1859 = vld [vmem:[#allocation12 + $0x1c] sm:$0xf]
          %v1860 = vld [vmem:[#allocation12 + $0x20] sm:$0xf]
          %v1861 = vld [vmem:[#allocation12 + $0x24] sm:$0xf]
          %v1862 = vld [vmem:[#allocation12 + $0x28] sm:$0xf]
          %v1863 = vld [vmem:[#allocation12 + $0x2c] sm:$0xf]
          %v1864 = vld [vmem:[#allocation12 + $0x30] sm:$0xf]
          %v1865 = vld [vmem:[#allocation12 + $0x34] sm:$0xf]
          %v1866 = vld [vmem:[#allocation12 + $0x38] sm:$0xf]
          %v1867 = vld [vmem:[#allocation12 + $0x3c] sm:$0xf]
          %v1868 = vld [vmem:[%s7] sm:$0x1]
          %v1870 = vlaneseq
          %v1871 = vshrl.u32 %v1870, 7
          %v1872 = vsub.s32 0, %v1871
          %v1873 = vrot.slane %v1868, %v1872
          %v1891 = vunpack.c.l.b16 %v1852
          %v1892 = vunpack.c.l.b16 %v1853
          %v1893 = vunpack.c.l.b16 %v1854
          %v1894 = vunpack.c.l.b16 %v1855
          %v1895 = vunpack.c.l.b16 %v1856
          %v1896 = vunpack.c.l.b16 %v1857
          %v1897 = vunpack.c.l.b16 %v1858
          %v1898 = vunpack.c.l.b16 %v1859
          %v1899 = vunpack.c.l.b16 %v1860
          %v1900 = vunpack.c.l.b16 %v1861
          %v1901 = vunpack.c.l.b16 %v1862
          %v1902 = vunpack.c.l.b16 %v1863
          %v1903 = vunpack.c.l.b16 %v1864
          %v1904 = vunpack.c.l.b16 %v1865
          %v1905 = vunpack.c.l.b16 %v1866
          %v1906 = vunpack.c.l.b16 %v1867
          %v1907 = vpack.c.b16 %v1892, %v1891
          %v1908 = vpack.c.b16 %v1894, %v1893
          %v1909 = vpack.c.b16 %v1896, %v1895
          %v1910 = vpack.c.b16 %v1898, %v1897
          %v1911 = vpack.c.b16 %v1900, %v1899
          %v1912 = vpack.c.b16 %v1902, %v1901
          %v1913 = vpack.c.b16 %v1904, %v1903
          %v1914 = vpack.c.b16 %v1906, %v1905
          %1923 = vmatprep.subr.bf16.mxu0 0
          %1924 = vmatpush1.bf16.msra.mxu0 %v1914
          %1925 = vmatprep.subr.bf16.mxu0 0
          %1926 = vmatpush1.bf16.msra.mxu0 %v1913
          %1927 = vmatprep.subr.bf16.mxu0 0
          %1928 = vmatpush1.bf16.msra.mxu0 %v1912
          %1929 = vmatprep.subr.bf16.mxu0 0
          %1930 = vmatpush1.bf16.msra.mxu0 %v1911
          %1931 = vmatprep.subr.bf16.mxu0 0
          %1932 = vmatpush1.bf16.msra.mxu0 %v1910
          %1933 = vmatprep.subr.bf16.mxu0 0
          %1934 = vmatpush1.bf16.msra.mxu0 %v1909
          %1935 = vmatprep.subr.bf16.mxu0 0
          %1936 = vmatpush1.bf16.msra.mxu0 %v1908
          %1937 = vmatprep.subr.bf16.mxu0 0
          %1938 = vmatpush1.bf16.msra.mxu0 %v1907
          %1939 = vmatprep.subr.bf16.mxu0 0
          %1940 = vmatpush2.bf16.msra.mxu0 0
          %1941 = vmatprep.subr.bf16.mxu0 0
          %1942 = vmatpush2.bf16.msra.mxu0 0
          %1943 = vmatprep.subr.bf16.mxu0 0
          %1944 = vmatpush2.bf16.msra.mxu0 0
          %1945 = vmatprep.subr.bf16.mxu0 0
          %1946 = vmatpush2.bf16.msra.mxu0 0
          %1947 = vmatprep.subr.bf16.mxu0 0
          %1948 = vmatpush2.bf16.msra.mxu0 0
          %1949 = vmatprep.subr.bf16.mxu0 0
          %1950 = vmatpush2.bf16.msra.mxu0 0
          %1951 = vmatprep.subr.bf16.mxu0 0
          %1952 = vmatpush2.bf16.msra.mxu0 0
          %1953 = vmatprep.subr.bf16.mxu0 0
          %1954 = vmatpush2.bf16.msra.mxu0 0
          %1955 = vmatprep.mubr.bf16.mxu0 0
          %1956 = vmatmul.mubr.bf16.gmra.mxu0 %v1828
          %v1957 = vpop.f32.mrf.mxu0
          %v1958 = vadd.f32 %v1873, %v1957
          %v1959 = vpop.f32.mrf.mxu0
          %v1960 = vpop.f32.mrf.mxu0
          %v1961 = vadd.f32 %v1873, %v1960
          %v1962 = vpop.f32.mrf.mxu0
          %1963 = vmatprep.mubr.bf16.mxu0 0
          %1964 = vmatmul.mubr.bf16.gmra.mxu0 %v1829
          %v1965 = vpop.f32.mrf.mxu0
          %v1966 = vadd.f32 %v1873, %v1965
          %v1967 = vpop.f32.mrf.mxu0
          %v1968 = vpop.f32.mrf.mxu0
          %v1969 = vadd.f32 %v1873, %v1968
          %v1970 = vpop.f32.mrf.mxu0
          %1971 = vmatprep.mubr.bf16.mxu0 0
          %1972 = vmatmul.mubr.bf16.gmra.mxu0 %v1830
          %v1973 = vpop.f32.mrf.mxu0
          %v1974 = vadd.f32 %v1873, %v1973
          %v1975 = vpop.f32.mrf.mxu0
          %v1976 = vpop.f32.mrf.mxu0
          %v1977 = vadd.f32 %v1873, %v1976
          %v1978 = vpop.f32.mrf.mxu0
          %1979 = vmatprep.mubr.bf16.mxu0 0
          %1980 = vmatmul.mubr.bf16.gmra.mxu0 %v1831
          %v1981 = vpop.f32.mrf.mxu0
          %v1982 = vadd.f32 %v1873, %v1981
          %v1983 = vpop.f32.mrf.mxu0
          %v1984 = vpop.f32.mrf.mxu0
          %v1985 = vadd.f32 %v1873, %v1984
          %v1986 = vpop.f32.mrf.mxu0
          %1987 = vmatprep.mubr.bf16.mxu0 0
          %1988 = vmatmul.mubr.bf16.gmra.mxu0 %v1832
          %v1989 = vpop.f32.mrf.mxu0
          %v1990 = vadd.f32 %v1873, %v1989
          %v1991 = vpop.f32.mrf.mxu0
          %v1992 = vpop.f32.mrf.mxu0
          %v1993 = vadd.f32 %v1873, %v1992
          %v1994 = vpop.f32.mrf.mxu0
          %1995 = vmatprep.mubr.bf16.mxu0 0
          %1996 = vmatmul.mubr.bf16.gmra.mxu0 %v1833
          %v1997 = vpop.f32.mrf.mxu0
          %v1998 = vadd.f32 %v1873, %v1997
          %v1999 = vpop.f32.mrf.mxu0
          %v2000 = vpop.f32.mrf.mxu0
          %v2001 = vadd.f32 %v1873, %v2000
          %v2002 = vpop.f32.mrf.mxu0
          %2003 = vmatprep.mubr.bf16.mxu0 0
          %2004 = vmatmul.mubr.bf16.gmra.mxu0 %v1834
          %v2005 = vpop.f32.mrf.mxu0
          %v2006 = vadd.f32 %v1873, %v2005
          %v2007 = vpop.f32.mrf.mxu0
          %v2008 = vpop.f32.mrf.mxu0
          %v2009 = vadd.f32 %v1873, %v2008
          %v2010 = vpop.f32.mrf.mxu0
          %2011 = vmatprep.mubr.bf16.mxu0 0
          %2012 = vmatmul.mubr.bf16.gmra.mxu0 %v1835
          %v2013 = vpop.f32.mrf.mxu0
          %v2014 = vadd.f32 %v1873, %v2013
          %v2015 = vpop.f32.mrf.mxu0
          %v2016 = vpop.f32.mrf.mxu0
          %v2017 = vadd.f32 %v1873, %v2016
          %v2018 = vpop.f32.mrf.mxu0
          %2019 = vmatprep.mubr.bf16.mxu0 0
          %2020 = vmatmul.mubr.bf16.gmra.mxu0 %v1836
          %v2021 = vpop.f32.mrf.mxu0
          %v2022 = vadd.f32 %v1873, %v2021
          %v2023 = vpop.f32.mrf.mxu0
          %v2024 = vpop.f32.mrf.mxu0
          %v2025 = vadd.f32 %v1873, %v2024
          %v2026 = vpop.f32.mrf.mxu0
          %2027 = vmatprep.mubr.bf16.mxu0 0
          %2028 = vmatmul.mubr.bf16.gmra.mxu0 %v1837
          %v2029 = vpop.f32.mrf.mxu0
          %v2030 = vadd.f32 %v1873, %v2029
          %v2031 = vpop.f32.mrf.mxu0
          %v2032 = vpop.f32.mrf.mxu0
          %v2033 = vadd.f32 %v1873, %v2032
          %v2034 = vpop.f32.mrf.mxu0
          %2035 = vmatprep.mubr.bf16.mxu0 0
          %2036 = vmatmul.mubr.bf16.gmra.mxu0 %v1838
          %v2037 = vpop.f32.mrf.mxu0
          %v2038 = vadd.f32 %v1873, %v2037
          %v2039 = vpop.f32.mrf.mxu0
          %v2040 = vpop.f32.mrf.mxu0
          %v2041 = vadd.f32 %v1873, %v2040
          %v2042 = vpop.f32.mrf.mxu0
          %2043 = vmatprep.mubr.bf16.mxu0 0
          %2044 = vmatmul.mubr.bf16.gmra.mxu0 %v1839
          %v2045 = vpop.f32.mrf.mxu0
          %v2046 = vadd.f32 %v1873, %v2045
          %v2047 = vpop.f32.mrf.mxu0
          %v2048 = vpop.f32.mrf.mxu0
          %v2049 = vadd.f32 %v1873, %v2048
          %v2050 = vpop.f32.mrf.mxu0
          %2051 = vmatprep.mubr.bf16.mxu0 0
          %2052 = vmatmul.mubr.bf16.gmra.mxu0 %v1840
          %v2053 = vpop.f32.mrf.mxu0
          %v2054 = vadd.f32 %v1873, %v2053
          %v2055 = vpop.f32.mrf.mxu0
          %v2056 = vpop.f32.mrf.mxu0
          %v2057 = vadd.f32 %v1873, %v2056
          %v2058 = vpop.f32.mrf.mxu0
          %2059 = vmatprep.mubr.bf16.mxu0 0
          %2060 = vmatmul.mubr.bf16.gmra.mxu0 %v1841
          %v2061 = vpop.f32.mrf.mxu0
          %v2062 = vadd.f32 %v1873, %v2061
          %v2063 = vpop.f32.mrf.mxu0
          %v2064 = vpop.f32.mrf.mxu0
          %v2065 = vadd.f32 %v1873, %v2064
          %v2066 = vpop.f32.mrf.mxu0
          %2067 = vmatprep.mubr.bf16.mxu0 0
          %2068 = vmatmul.mubr.bf16.gmra.mxu0 %v1842
          %v2069 = vpop.f32.mrf.mxu0
          %v2070 = vadd.f32 %v1873, %v2069
          %v2071 = vpop.f32.mrf.mxu0
          %v2072 = vpop.f32.mrf.mxu0
          %v2073 = vadd.f32 %v1873, %v2072
          %v2074 = vpop.f32.mrf.mxu0
          %2075 = vmatprep.mubr.bf16.mxu0 0
          %2076 = vmatmul.mubr.bf16.gmra.mxu0 %v1843
          %v2077 = vpop.f32.mrf.mxu0
          %v2078 = vadd.f32 %v1873, %v2077
          %v2079 = vpop.f32.mrf.mxu0
          %v2080 = vpop.f32.mrf.mxu0
          %v2081 = vadd.f32 %v1873, %v2080
          %v2082 = vpop.f32.mrf.mxu0
          %2083 = vmatprep.mubr.bf16.mxu0 0
          %2084 = vmatmul.mubr.bf16.gmra.mxu0 %v1844
          %v2085 = vpop.f32.mrf.mxu0
          %v2086 = vadd.f32 %v1873, %v2085
          %v2087 = vpop.f32.mrf.mxu0
          %v2088 = vpop.f32.mrf.mxu0
          %v2089 = vadd.f32 %v1873, %v2088
          %v2090 = vpop.f32.mrf.mxu0
          %2091 = vmatprep.mubr.bf16.mxu0 0
          %2092 = vmatmul.mubr.bf16.gmra.mxu0 %v1845
          %v2093 = vpop.f32.mrf.mxu0
          %v2094 = vadd.f32 %v1873, %v2093
          %v2095 = vpop.f32.mrf.mxu0
          %v2096 = vpop.f32.mrf.mxu0
          %v2097 = vadd.f32 %v1873, %v2096
          %v2098 = vpop.f32.mrf.mxu0
          %2099 = vmatprep.mubr.bf16.mxu0 0
          %2100 = vmatmul.mubr.bf16.gmra.mxu0 %v1846
          %v2101 = vpop.f32.mrf.mxu0
          %v2102 = vadd.f32 %v1873, %v2101
          %v2103 = vpop.f32.mrf.mxu0
          %v2104 = vpop.f32.mrf.mxu0
          %v2105 = vadd.f32 %v1873, %v2104
          %v2106 = vpop.f32.mrf.mxu0
          %2107 = vmatprep.mubr.bf16.mxu0 0
          %2108 = vmatmul.mubr.bf16.gmra.mxu0 %v1847
          %v2109 = vpop.f32.mrf.mxu0
          %v2110 = vadd.f32 %v1873, %v2109
          %v2111 = vpop.f32.mrf.mxu0
          %v2112 = vpop.f32.mrf.mxu0
          %v2113 = vadd.f32 %v1873, %v2112
          %v2114 = vpop.f32.mrf.mxu0
          %2115 = vmatprep.mubr.bf16.mxu0 0
          %2116 = vmatmul.mubr.bf16.gmra.mxu0 %v1848
          %v2117 = vpop.f32.mrf.mxu0
          %v2118 = vadd.f32 %v1873, %v2117
          %v2119 = vpop.f32.mrf.mxu0
          %v2120 = vpop.f32.mrf.mxu0
          %v2121 = vadd.f32 %v1873, %v2120
          %v2122 = vpop.f32.mrf.mxu0
          %2123 = vmatprep.mubr.bf16.mxu0 0
          %2124 = vmatmul.mubr.bf16.gmra.mxu0 %v1849
          %v2125 = vpop.f32.mrf.mxu0
          %v2126 = vadd.f32 %v1873, %v2125
          %v2127 = vpop.f32.mrf.mxu0
          %v2128 = vpop.f32.mrf.mxu0
          %v2129 = vadd.f32 %v1873, %v2128
          %v2130 = vpop.f32.mrf.mxu0
          %2131 = vmatprep.mubr.bf16.mxu0 0
          %2132 = vmatmul.mubr.bf16.gmra.mxu0 %v1850
          %v2133 = vpop.f32.mrf.mxu0
          %v2134 = vadd.f32 %v1873, %v2133
          %v2135 = vpop.f32.mrf.mxu0
          %v2136 = vpop.f32.mrf.mxu0
          %v2137 = vadd.f32 %v1873, %v2136
          %v2138 = vpop.f32.mrf.mxu0
          %2139 = vmatprep.mubr.bf16.mxu0 0
          %2140 = vmatmul.mubr.bf16.gmra.mxu0 %v1851
          %v2141 = vpop.f32.mrf.mxu0
          %v2142 = vadd.f32 %v1873, %v2141
          %v2143 = vpop.f32.mrf.mxu0
          %v2144 = vpop.f32.mrf.mxu0
          %v2145 = vadd.f32 %v1873, %v2144
          %v2146 = vpop.f32.mrf.mxu0
          %2147 = vdwg.mxu0
          %2148 = vst [vmem:[#allocation14] sm:$0xff] %v1958
          %2149 = vst [vmem:[#allocation14 + $0x8] sm:$0xff] %v1961
          %2150 = vst [vmem:[#allocation14 + $0x10] sm:$0xff] %v1966
          %2151 = vst [vmem:[#allocation14 + $0x18] sm:$0xff] %v1969
          %2152 = vst [vmem:[#allocation14 + $0x20] sm:$0xff] %v1974
          %2153 = vst [vmem:[#allocation14 + $0x28] sm:$0xff] %v1977
          %2154 = vst [vmem:[#allocation14 + $0x30] sm:$0xff] %v1982
          %2155 = vst [vmem:[#allocation14 + $0x38] sm:$0xff] %v1985
          %2156 = vst [vmem:[#allocation14 + $0x40] sm:$0xff] %v1990
          %2157 = vst [vmem:[#allocation14 + $0x48] sm:$0xff] %v1993
          %2158 = vst [vmem:[#allocation14 + $0x50] sm:$0xff] %v1998
          %2159 = vst [vmem:[#allocation14 + $0x58] sm:$0xff] %v2001
          %2160 = vst [vmem:[#allocation14 + $0x60] sm:$0xff] %v2006
          %2161 = vst [vmem:[#allocation14 + $0x68] sm:$0xff] %v2009
          %2162 = vst [vmem:[#allocation14 + $0x70] sm:$0xff] %v2014
          %2163 = vst [vmem:[#allocation14 + $0x78] sm:$0xff] %v2017
          %2164 = vst [vmem:[#allocation14 + $0x80] sm:$0xff] %v2022
          %2165 = vst [vmem:[#allocation14 + $0x88] sm:$0xff] %v2025
          %2166 = vst [vmem:[#allocation14 + $0x90] sm:$0xff] %v2030
          %2167 = vst [vmem:[#allocation14 + $0x98] sm:$0xff] %v2033
          %2168 = vst [vmem:[#allocation14 + $0xa0] sm:$0xff] %v2038
          %2169 = vst [vmem:[#allocation14 + $0xa8] sm:$0xff] %v2041
          %2170 = vst [vmem:[#allocation14 + $0xb0] sm:$0xff] %v2046
          %2171 = vst [vmem:[#allocation14 + $0xb8] sm:$0xff] %v2049
          %2172 = vst [vmem:[#allocation14 + $0xc0] sm:$0xff] %v2054
          %2173 = vst [vmem:[#allocation14 + $0xc8] sm:$0xff] %v2057
          %2174 = vst [vmem:[#allocation14 + $0xd0] sm:$0xff] %v2062
          %2175 = vst [vmem:[#allocation14 + $0xd8] sm:$0xff] %v2065
          %2176 = vst [vmem:[#allocation14 + $0xe0] sm:$0xff] %v2070
          %2177 = vst [vmem:[#allocation14 + $0xe8] sm:$0xff] %v2073
          %2178 = vst [vmem:[#allocation14 + $0xf0] sm:$0xff] %v2078
          %2179 = vst [vmem:[#allocation14 + $0xf8] sm:$0xff] %v2081
          %2180 = vst [vmem:[#allocation14 + $0x100] sm:$0xff] %v2086
          %2181 = vst [vmem:[#allocation14 + $0x108] sm:$0xff] %v2089
          %2182 = vst [vmem:[#allocation14 + $0x110] sm:$0xff] %v2094
          %2183 = vst [vmem:[#allocation14 + $0x118] sm:$0xff] %v2097
          %2184 = vst [vmem:[#allocation14 + $0x120] sm:$0xff] %v2102
          %2185 = vst [vmem:[#allocation14 + $0x128] sm:$0xff] %v2105
          %2186 = vst [vmem:[#allocation14 + $0x130] sm:$0xff] %v2110
          %2187 = vst [vmem:[#allocation14 + $0x138] sm:$0xff] %v2113
          %2188 = vst [vmem:[#allocation14 + $0x140] sm:$0xff] %v2118
          %2189 = vst [vmem:[#allocation14 + $0x148] sm:$0xff] %v2121
          %2190 = vst [vmem:[#allocation14 + $0x150] sm:$0xff] %v2126
          %2191 = vst [vmem:[#allocation14 + $0x158] sm:$0xff] %v2129
          %2192 = vst [vmem:[#allocation14 + $0x160] sm:$0xff] %v2134
          %2193 = vst [vmem:[#allocation14 + $0x168] sm:$0xff] %v2137
          %2194 = vst [vmem:[#allocation14 + $0x170] sm:$0xff] %v2142
          %2195 = vst [vmem:[#allocation14 + $0x178] sm:$0xff] %v2145
        $region80: #{tpu_custom_call.1} parent=39 // pred_fallthru
          _
        // Predicated region
        $region81: #{tpu_custom_call.1} parent=39 // pred_check
          %p2196 = pneg %p148
        $region82: #{tpu_custom_call.1} parent=39 // pred_check_branch
          %2198 = sbr.rel (%p2196) target = $region84
        $region83: #{tpu_custom_call.1} parent=39 // pred_region
          %s2200 = ssub.s32 6144, 6144
          %2201 = vsyncadd [#allocation9], %s2200
          %s2202 = sshll.u32 [#allocation14], 4
          %s2203 = int_to_ptr.vmem [resolvable:$true] %s2202
          %2208 = dma.vmem_to_hbm [thread:$0]  %s2203, 6144, %s8, [#allocation9], 128, 128, 8
        $region84: #{tpu_custom_call.1} parent=39 // pred_fallthru
          _
        // Predicated region
        $region85: #{tpu_custom_call.1} parent=39 // pred_check
          %p2209 = pneg %p148
        $region86: #{tpu_custom_call.1} parent=39 // pred_check_branch
          %2211 = sbr.rel (%p2209) target = $region88
        $region87: #{tpu_custom_call.1} parent=39 // pred_region
          %2212 = dma.done [#allocation9], 6144
        $region88: #{tpu_custom_call.1} parent=39 // pred_fallthru
          _
      $region40: #{tpu_custom_call.1} parent=5 // pred_fallthru
        _
      %p2213 = scmp.le.s32.totalorder 2, %s20
      // Predicated region
      $region89: #{tpu_custom_call.1} parent=5 // pred_check
        %p2214 = pneg %p2213
      $region90: #{tpu_custom_call.1} parent=5 // pred_check_branch
        %2216 = sbr.rel (%p2214) target = $region92
      $region91: #{tpu_custom_call.1} parent=5 // pred_region
        %s2217 = ssub.s32 %s20, 2
      $region92: #{tpu_custom_call.1} parent=5 // pred_fallthru
        _
    $region6: #{tpu_custom_call.1} parent=1 // loop_footer
      %s24 = sadd.s32 1, %s20
    $region7: #{tpu_custom_call.1} parent=1 // loop_footer_branch
      %19 = sbr.rel target = $region3
    $region8: #{tpu_custom_call.1} parent=1 // loop_exit
      _
    %2218 = vsyncpa [#allocation8], 1
    %s2219 = scalar_lea.sflag [#allocation8], 1
    %2220 = vsyncpa %s2219, 1
    %2221 = vsyncpa [#allocation13], 1
    %2222 = vsyncpa [#allocation9], 1
    %s2223 = scalar_lea.sflag [#allocation9], 1
    %2224 = vsyncpa %s2223, 1
    %2225 = vsyncpa [#allocation10], 1
    %s2226 = scalar_lea.sflag [#allocation10], 1
    %2227 = vsyncpa %s2226, 1
  %2228 = vsyncmov [#allocation6]
  %s2229 = vpop.sfrf %2228
  %p2230 = scmp.eq.s32.totalorder %s2229, 0
  %p2231 = pneg %p2230
  %2233 = shalt.err (%p2231)
  %s2234 = scalar_lea.sflag [#allocation6], 1
  %2235 = vsyncmov %s2234
  %s2236 = vpop.sfrf %2235
  %p2237 = scmp.eq.s32.totalorder %s2236, 0
  %p2238 = pneg %p2237
  %2240 = shalt.err (%p2238)
  %s2241 = scalar_lea.sflag [#allocation6], 2
  %2242 = vsyncmov %s2241
  %s2243 = vpop.sfrf %2242
  %p2244 = scmp.eq.s32.totalorder %s2243, 0
  %p2245 = pneg %p2244
  %2247 = shalt.err (%p2245)

</llo_original>
